<compile_context>
chip_gen: v7x
topology: tpu7x:2x2x1
jax: 0.10.0
libtpu: 0.0.40
codegen_flags: <defaults>
</compile_context>

<pallas_src>
import functools
import math

import jax
import jax.numpy as jnp
from jax.experimental import pallas as pl
from jax.experimental.pallas import tpu as pltpu

HEADS = 2
NEG_BIG = -1e30  # finite "minus infinity": keeps exp()/rescale free of inf/nan


def _graph_attn_kernel(first_ref, count_ref,                       # scalar prefetch (SMEM)
                       x_ref, dst_ref, xk_ref, xv_ref, wqs_ref, bqs_ref,
                       out_ref,
                       q_sc, skip_sc, m_sc, l_sc, acc_sc,
                       *, tile_n, tile_e, d_head, mxu_bf16):
    f32 = jnp.float32
    i = pl.program_id(0)
    j = pl.program_id(1)
    hd = HEADS * d_head

    @pl.when(j == 0)
    def _init():
        # One fused [tile_n, F] @ [F, 2*HD] matmul: [q (pre-scaled by 1/sqrt(D)) | skip].
        qs = (jnp.dot(x_ref[...], wqs_ref[...], preferred_element_type=f32)
              + bqs_ref[...])
        for h in range(HEADS):
            q_sc[h] = qs[:, h * d_head:(h + 1) * d_head]
        skip_sc[...] = qs[:, hd:]
        m_sc[...] = jnp.full_like(m_sc, NEG_BIG)
        l_sc[...] = jnp.zeros_like(l_sc)
        acc_sc[...] = jnp.zeros_like(acc_sc)

    # Only the edge tiles that contain this row tile's (dst-sorted) edges are
    # processed; the index_map clamps the DMA to those tiles, so skipped steps
    # re-use the already-resident block (no HBM traffic, no compute).
    @pl.when(j < count_ref[i])
    def _step():
        row0 = i * tile_n
        row_ids = row0 + jax.lax.broadcasted_iota(jnp.int32, (tile_n, tile_e), 0)
        match = row_ids == dst_ref[...]                            # [tile_n, tile_e]
        bias = jnp.where(match, 0.0, NEG_BIG)

        k = xk_ref[...]
        v = xv_ref[...]
        for h in range(HEADS):
            sl = slice(h * d_head, (h + 1) * d_head)
            qh, kh, vh = q_sc[h], k[:, sl], v[:, sl]
            if mxu_bf16:
                qh = qh.astype(jnp.bfloat16)
                kh = kh.astype(jnp.bfloat16)
            # NT contraction: the MXU consumes K directly, no transpose.
            s = jax.lax.dot_general(qh, kh, (((1,), (1,)), ((), ())),
                                    preferred_element_type=f32) + bias
            m_prev = m_sc[h]
            m_new = jnp.maximum(m_prev, jnp.max(s, axis=-1, keepdims=True))
            corr = jnp.exp(m_prev - m_new)
            p = jnp.exp(s - m_new)
            p = jnp.where(match, p, 0.0)        # hard gate: masked edges add exactly 0
            l_sc[h] = corr * l_sc[h] + jnp.sum(p, axis=-1, keepdims=True)
            if mxu_bf16:
                p = p.astype(jnp.bfloat16)
                vh = vh.astype(jnp.bfloat16)
            acc_sc[h] = corr * acc_sc[h] + jnp.dot(p, vh, preferred_element_type=f32)
            m_sc[h] = m_new

    @pl.when(j == pl.num_programs(1) - 1)
    def _finalize():
        outs = []
        for h in range(HEADS):
            l = l_sc[h]
            inv_l = jnp.where(l > 0.0, 1.0 / l, 0.0)   # exact; rows w/o in-edges -> 0
            outs.append(acc_sc[h] * inv_l)
        out_ref[...] = (jnp.concatenate(outs, axis=-1) + skip_sc[...]).astype(out_ref.dtype)


def _fuse_heads_w(w):   # [H, A, D] -> [A, H*D]
    return jnp.transpose(w, (1, 0, 2)).reshape(w.shape[1], -1)


def _fuse_heads_b(b):   # [H, 1, D] -> [1, H*D]
    return jnp.transpose(b, (1, 0, 2)).reshape(1, -1)


def graph_attention_embedding(x, last_update, edge_index, t, msg, params,
                              *, tile_n=128, tile_e=512, mxu_bf16=False):
    """Wrapper: edge projection hoist, dst-sort + per-tile ranges, padding, pallas_call."""
    N, F = x.shape
    E = edge_index.shape[1]
    D = params["wq"].shape[-1]
    HD = HEADS * D

    # --- tile hygiene --------------------------------------------------------
    tile_e = max(128, min(tile_e, pl.cdiv(E, 128) * 128))          # no gross over-padding
    # Keep >= 2 row tiles so the "parallel" N axis shards across v7x's two
    # TensorCores (megacore on v5e/v6e); keep tile_n a multiple of 8.
    while tile_n > 8 and pl.cdiv(N, tile_n) < 2:
        tile_n //= 2
    tile_n = max(8, (tile_n // 8) * 8)

    src = edge_index[0]
    dst = edge_index[1].astype(jnp.int32)

    # --- edge-side projections done once, at full E, outside the kernel -------
    wk_f, bk_f = _fuse_heads_w(params["wk"]), _fuse_heads_b(params["bk"])
    wv_f, bv_f = _fuse_heads_w(params["wv"]), _fuse_heads_b(params["bv"])
    wet_f, wem_f = _fuse_heads_w(params["wet"]), _fuse_heads_w(params["wem"])

    rel_t = (last_update[src] - t).astype(x.dtype)[:, None]        # [E, 1]
    rel_t_enc = jnp.cos(rel_t @ params["wt"] + params["bt"])       # [E, T]
    e_proj = rel_t_enc @ wet_f + msg @ wem_f                       # [E, H*D]
    xk_e = (x @ wk_f + bk_f)[src] + e_proj                         # [E, H*D]
    xv_e = (x @ wv_f + bv_f)[src] + e_proj                         # [E, H*D]

    # --- sort edges by destination so each row tile owns a contiguous range ---
    order = jnp.argsort(dst)
    dst_s = dst[order]
    xk_s = xk_e[order]
    xv_s = xv_e[order]

    # --- padding ---------------------------------------------------------------
    E_pad = pl.cdiv(E, tile_e) * tile_e
    N_pad = pl.cdiv(N, tile_n) * tile_n
    pe, pn = E_pad - E, N_pad - N
    dst_p = jnp.pad(dst_s, (0, pe), constant_values=N_pad)[None, :]   # sentinel never matches
    xk_p = jnp.pad(xk_s, ((0, pe), (0, 0)))
    xv_p = jnp.pad(xv_s, ((0, pe), (0, 0)))
    x_p = jnp.pad(x, ((0, pn), (0, 0)))

    n_row_tiles = N_pad // tile_n
    n_edge_tiles = E_pad // tile_e

    # --- per-row-tile edge-tile ranges (scalar prefetch) -----------------------
    row_lo = jnp.arange(n_row_tiles, dtype=jnp.int32) * tile_n
    e_start = jnp.searchsorted(dst_s, row_lo, side="left").astype(jnp.int32)
    e_end = jnp.searchsorted(dst_s, row_lo + tile_n, side="left").astype(jnp.int32)
    first_tile = jnp.minimum(e_start // tile_e, n_edge_tiles - 1).astype(jnp.int32)
    last_tile = jnp.where(e_end > e_start, (e_end - 1) // tile_e, first_tile - 1)
    num_tiles = jnp.maximum(last_tile - first_tile + 1, 0).astype(jnp.int32)

    # --- fused query/skip weights (1/sqrt(D) folded into the q half) -----------
    scale = 1.0 / math.sqrt(D)
    wqs = jnp.concatenate([_fuse_heads_w(params["wq"]) * scale, params["wskip"]], axis=1)
    bqs = jnp.concatenate([_fuse_heads_b(params["bq"]) * scale, params["bskip"]], axis=1)

    def edge_block(i, j, first_ref, count_ref):
        # Clamp to this row tile's last needed edge tile: once j >= count the index
        # repeats, so Pallas skips the re-DMA on the pl.when-skipped steps.
        jj = jnp.minimum(j, jnp.maximum(count_ref[i] - 1, 0))
        return first_ref[i] + jj

    kernel = functools.partial(_graph_attn_kernel, tile_n=tile_n, tile_e=tile_e,
                               d_head=D, mxu_bf16=mxu_bf16)

    out_pad = pl.pallas_call(
        kernel,
        out_shape=jax.ShapeDtypeStruct((N_pad, HD), x.dtype),
        grid_spec=pltpu.PrefetchScalarGridSpec(
            num_scalar_prefetch=2,
            grid=(n_row_tiles, n_edge_tiles),
            in_specs=[
                pl.BlockSpec((tile_n, F), lambda i, j, f, c: (i, 0)),                        # x
                pl.BlockSpec((1, tile_e), lambda i, j, f, c: (0, edge_block(i, j, f, c))),   # dst ids
                pl.BlockSpec((tile_e, HD), lambda i, j, f, c: (edge_block(i, j, f, c), 0)),  # K rows
                pl.BlockSpec((tile_e, HD), lambda i, j, f, c: (edge_block(i, j, f, c), 0)),  # V rows
                pl.BlockSpec((F, 2 * HD), lambda i, j, f, c: (0, 0)),                        # [wq*s | wskip]
                pl.BlockSpec((1, 2 * HD), lambda i, j, f, c: (0, 0)),                        # [bq*s | bskip]
            ],
            out_specs=pl.BlockSpec((tile_n, HD), lambda i, j, f, c: (i, 0)),
            scratch_shapes=[
                pltpu.VMEM((HEADS, tile_n, D), jnp.float32),   # q per head (pre-scaled)
                pltpu.VMEM((tile_n, HD), jnp.float32),         # skip connection
                pltpu.VMEM((HEADS, tile_n, 1), jnp.float32),   # running max m
                pltpu.VMEM((HEADS, tile_n, 1), jnp.float32),   # running denom l
                pltpu.VMEM((HEADS, tile_n, D), jnp.float32),   # running acc
            ],
        ),
        compiler_params=pltpu.CompilerParams(
            dimension_semantics=("parallel", "arbitrary"),
            # Working set < ~2 MiB even at tile_n=256/tile_e=1024; 32 MiB scoped
            # VMEM fits v5e/v6e (128 MiB physical) and v7x (64 MiB physical).
            vmem_limit_bytes=32 * 1024 * 1024,
        ),
    )(first_tile, num_tiles, x_p, dst_p, xk_p, xv_p, wqs, bqs)

    return out_pad[:N]


def init_params(key, in_channels, out_channels, msg_dim, time_dim):
    assert out_channels % HEADS == 0
    d = out_channels // HEADS
    ks = jax.random.split(key, 12)

    def w(k, shape, scale=0.1):
        return (scale * jax.random.normal(k, shape)).astype(jnp.float32)

    return dict(
        wt=w(ks[0], (1, time_dim)), bt=w(ks[1], (1, time_dim)),            # TimeEncoder Linear(1, T)
        wq=w(ks[2], (HEADS, in_channels, d)), bq=w(ks[3], (HEADS, 1, d)),  # lin_query
        wk=w(ks[4], (HEADS, in_channels, d)), bk=w(ks[5], (HEADS, 1, d)),  # lin_key
        wv=w(ks[6], (HEADS, in_channels, d)), bv=w(ks[7], (HEADS, 1, d)),  # lin_value
        wet=w(ks[8], (HEADS, time_dim, d)),                                # lin_edge (time part, no bias)
        wem=w(ks[9], (HEADS, msg_dim, d)),                                 # lin_edge (msg part,  no bias)
        wskip=w(ks[10], (in_channels, HEADS * d)), bskip=w(ks[11], (1, HEADS * d)),  # lin_skip
    )


def reference(x, last_update, edge_index, t, msg, p):
    """Pure-JAX reference (same math, segment softmax over dst)."""
    src, dst = edge_index[0], edge_index[1]
    N = x.shape[0]
    rel_t = (last_update[src] - t).astype(x.dtype)[:, None]
    rel_t_enc = jnp.cos(rel_t @ p["wt"] + p["bt"])
    heads = []
    for h in range(HEADS):
        e_proj = rel_t_enc @ p["wet"][h] + msg @ p["wem"][h]
        q = x @ p["wq"][h] + p["bq"][h]
        k = x[src] @ p["wk"][h] + p["bk"][h] + e_proj
        v = x[src] @ p["wv"][h] + p["bv"][h] + e_proj
        d = q.shape[-1]
        score = jnp.sum(q[dst] * k, axis=-1) / jnp.sqrt(jnp.float32(d))   # [E]
        mask = dst[None, :] == jnp.arange(N)[:, None]                     # [N, E]
        m = jnp.max(jnp.where(mask, score[None, :], -jnp.inf), axis=-1, keepdims=True)
        m = jnp.where(jnp.isfinite(m), m, 0.0)
        pexp = jnp.where(mask, jnp.exp(score[None, :] - m), 0.0)
        denom = jnp.maximum(jnp.sum(pexp, -1, keepdims=True), 1e-30)
        heads.append((pexp / denom) @ v)
    return jnp.concatenate(heads, -1) + x @ p["wskip"] + p["bskip"]


if __name__ == "__main__":
    key = jax.random.PRNGKey(0)
    N, E = 50, 200                       # exercises multiple row/edge tiles + padding
    in_channels, out_channels = 32, 32
    msg_dim, time_dim = 16, 8

    k_par, k_x, k_lu, k_ei, k_t, k_msg = jax.random.split(key, 6)
    params = init_params(k_par, in_channels, out_channels, msg_dim, time_dim)

    x = jax.random.normal(k_x, (N, in_channels), jnp.float32)
    last_update = jax.random.uniform(k_lu, (N,), jnp.float32, 0.0, 100.0)
    edge_index = jax.random.randint(k_ei, (2, E), 0, N, dtype=jnp.int32)
    t = jax.random.uniform(k_t, (E,), jnp.float32, 0.0, 100.0)
    msg = jax.random.normal(k_msg, (E, msg_dim), jnp.float32)

    ref = reference(x, last_update, edge_index, t, msg, params)

    # Tolerance covers TPU MXU default-precision (bf16-pass) f32 matmuls vs. the XLA
    # reference; in interpret mode / full-precision the error is ~1e-6.
    def check(out):
        out = jax.block_until_ready(out)
        assert out.shape == (N, out_channels), out.shape
        err = float(jnp.max(jnp.abs(out - ref)))
        assert jnp.allclose(out, ref, atol=2e-2, rtol=2e-2), err

    # Small explicit tiles: 2 row tiles x 2 edge tiles, exercises skip/clamp path.
    check(graph_attention_embedding(x, last_update, edge_index, t, msg, params,
                                    tile_n=32, tile_e=128))
    # Default (large) tiles: exercises the auto-shrink/clamp tile hygiene.
    check(graph_attention_embedding(x, last_update, edge_index, t, msg, params))

    print("KERNEL_OK")
</pallas_src>

<mosaic_0001>
module attributes {stable_mosaic.version = 11 : i64} {
  func.func @_graph_attn_kernel(%arg0: i32, %arg1: i32, %arg2: memref<2xi32, #tpu.memory_space<smem>>, %arg3: memref<2xi32, #tpu.memory_space<smem>>, %arg4: memref<32x32xf32, #tpu.memory_space<vmem>>, %arg5: memref<1x128xi32, #tpu.memory_space<vmem>>, %arg6: memref<128x32xf32, #tpu.memory_space<vmem>>, %arg7: memref<128x32xf32, #tpu.memory_space<vmem>>, %arg8: memref<32x64xf32, #tpu.memory_space<vmem>>, %arg9: memref<1x64xf32, #tpu.memory_space<vmem>>, %arg10: memref<32x32xf32, #tpu.memory_space<vmem>>, %arg11: memref<2x32x16xf32, #tpu.memory_space<vmem>>, %arg12: memref<32x32xf32, #tpu.memory_space<vmem>>, %arg13: memref<2x32x1xf32, #tpu.memory_space<vmem>>, %arg14: memref<2x32x1xf32, #tpu.memory_space<vmem>>, %arg15: memref<2x32x16xf32, #tpu.memory_space<vmem>>) attributes {dimension_semantics = [#tpu.dimension_semantics<parallel>, #tpu.dimension_semantics<arbitrary>], iteration_bounds = array<i64: 2, 2>, scalar_prefetch = 2 : i64, scratch_operands = 5 : i64, tpu.core_type = #tpu.core_type<tc>, window_params = [{transform_indices = @transform_0, window_bounds = array<i64: 32, 32>}, {transform_indices = @transform_1, window_bounds = array<i64: 1, 128>}, {transform_indices = @transform_2, window_bounds = array<i64: 128, 32>}, {transform_indices = @transform_3, window_bounds = array<i64: 128, 32>}, {pipeline_mode = #tpu.pipeline_mode<synchronous>, transform_indices = @transform_4, window_bounds = array<i64: 32, 64>}, {pipeline_mode = #tpu.pipeline_mode<synchronous>, transform_indices = @transform_5, window_bounds = array<i64: 1, 64>}, {transform_indices = @transform_6, window_bounds = array<i64: 32, 32>}]} {
    %c0_i32 = arith.constant 0 : i32
    %0 = arith.cmpi eq, %arg1, %c0_i32 : i32
    %1 = arith.extui %0 : i1 to i32
    %c0_i32_0 = arith.constant 0 : i32
    %2 = arith.cmpi ne, %1, %c0_i32_0 : i32
    scf.if %2 {
      %c0 = arith.constant 0 : index
      %c0_3 = arith.constant 0 : index
      %11 = vector.load %arg4[%c0, %c0_3] : memref<32x32xf32, #tpu.memory_space<vmem>>, vector<32x32xf32>
      %c0_4 = arith.constant 0 : index
      %c0_5 = arith.constant 0 : index
      %12 = vector.load %arg8[%c0_4, %c0_5] : memref<32x64xf32, #tpu.memory_space<vmem>>, vector<32x64xf32>
      %cst = arith.constant dense<0.000000e+00> : vector<32x64xf32>
      %13 = tpu.matmul %11, %12, %cst {dimension_numbers = #tpu.dot_dimension_numbers<[1], [0], [0], [1], [0, 0, 1, 1], [], []>} : vector<32x32xf32>, vector<32x64xf32>, vector<32x64xf32> -> vector<32x64xf32>
      %c0_6 = arith.constant 0 : index
      %c0_7 = arith.constant 0 : index
      %14 = vector.load %arg9[%c0_6, %c0_7] : memref<1x64xf32, #tpu.memory_space<vmem>>, vector<1x64xf32>
      %15 = vector.broadcast %14 : vector<1x64xf32> to vector<32x64xf32>
      %16 = arith.addf %13, %15 : vector<32x64xf32>
      %17 = vector.extract_strided_slice %16 {offsets = [0, 0], sizes = [32, 16], strides = [1, 1]} : vector<32x64xf32> to vector<32x16xf32>
      %c0_8 = arith.constant 0 : index
      %c0_9 = arith.constant 0 : index
      %c0_10 = arith.constant 0 : index
      %18 = vector.load %arg11[%c0_8, %c0_9, %c0_10] : memref<2x32x16xf32, #tpu.memory_space<vmem>>, vector<1x32x16xf32>
      %19 = vector.shape_cast %18 : vector<1x32x16xf32> to vector<32x16xf32>
      %20 = vector.shape_cast %17 : vector<32x16xf32> to vector<1x32x16xf32>
      tpu.vector_store %arg11[%c0_8, %c0_9, %c0_10], %20 {strides = array<i32>} : memref<2x32x16xf32, #tpu.memory_space<vmem>>, vector<1x32x16xf32>,
      %21 = vector.extract_strided_slice %16 {offsets = [0, 16], sizes = [32, 16], strides = [1, 1]} : vector<32x64xf32> to vector<32x16xf32>
      %c1 = arith.constant 1 : index
      %c0_11 = arith.constant 0 : index
      %c0_12 = arith.constant 0 : index
      %22 = vector.load %arg11[%c1, %c0_11, %c0_12] : memref<2x32x16xf32, #tpu.memory_space<vmem>>, vector<1x32x16xf32>
      %23 = vector.shape_cast %22 : vector<1x32x16xf32> to vector<32x16xf32>
      %24 = vector.shape_cast %21 : vector<32x16xf32> to vector<1x32x16xf32>
      tpu.vector_store %arg11[%c1, %c0_11, %c0_12], %24 {strides = array<i32>} : memref<2x32x16xf32, #tpu.memory_space<vmem>>, vector<1x32x16xf32>,
      %25 = vector.extract_strided_slice %16 {offsets = [0, 32], sizes = [32, 32], strides = [1, 1]} : vector<32x64xf32> to vector<32x32xf32>
      %c0_13 = arith.constant 0 : index
      %c0_14 = arith.constant 0 : index
      %26 = vector.load %arg12[%c0_13, %c0_14] : memref<32x32xf32, #tpu.memory_space<vmem>>, vector<32x32xf32>
      tpu.vector_store %arg12[%c0_13, %c0_14], %25 {strides = array<i32>} : memref<32x32xf32, #tpu.memory_space<vmem>>, vector<32x32xf32>,
      %cst_15 = arith.constant -1.000000e+30 : f32
      %27 = vector.broadcast %cst_15 : f32 to vector<2x32x1xf32>
      %c0_16 = arith.constant 0 : index
      %c0_17 = arith.constant 0 : index
      %c0_18 = arith.constant 0 : index
      %28 = vector.load %arg13[%c0_16, %c0_17, %c0_18] : memref<2x32x1xf32, #tpu.memory_space<vmem>>, vector<2x32x1xf32>
      tpu.vector_store %arg13[%c0_16, %c0_17, %c0_18], %27 {strides = array<i32>} : memref<2x32x1xf32, #tpu.memory_space<vmem>>, vector<2x32x1xf32>,
      %cst_19 = arith.constant 0.000000e+00 : f32
      %29 = vector.broadcast %cst_19 : f32 to vector<2x32x1xf32>
      %c0_20 = arith.constant 0 : index
      %c0_21 = arith.constant 0 : index
      %c0_22 = arith.constant 0 : index
      %30 = vector.load %arg14[%c0_20, %c0_21, %c0_22] : memref<2x32x1xf32, #tpu.memory_space<vmem>>, vector<2x32x1xf32>
      tpu.vector_store %arg14[%c0_20, %c0_21, %c0_22], %29 {strides = array<i32>} : memref<2x32x1xf32, #tpu.memory_space<vmem>>, vector<2x32x1xf32>,
      %cst_23 = arith.constant 0.000000e+00 : f32
      %31 = vector.broadcast %cst_23 : f32 to vector<2x32x16xf32>
      %c0_24 = arith.constant 0 : index
      %c0_25 = arith.constant 0 : index
      %c0_26 = arith.constant 0 : index
      %32 = vector.load %arg15[%c0_24, %c0_25, %c0_26] : memref<2x32x16xf32, #tpu.memory_space<vmem>>, vector<2x32x16xf32>
      tpu.vector_store %arg15[%c0_24, %c0_25, %c0_26], %31 {strides = array<i32>} : memref<2x32x16xf32, #tpu.memory_space<vmem>>, vector<2x32x16xf32>,
    } else {
    }
    %3 = arith.index_cast %arg0 : i32 to index
    %4 = memref.load %arg3[%3] : memref<2xi32, #tpu.memory_space<smem>>
    %5 = arith.cmpi slt, %arg1, %4 : i32
    %6 = arith.extui %5 : i1 to i32
    %c0_i32_1 = arith.constant 0 : i32
    %7 = arith.cmpi ne, %6, %c0_i32_1 : i32
    scf.if %7 {
      %c32_i32 = arith.constant 32 : i32
      %11 = arith.muli %arg0, %c32_i32 : i32
      %12 = tpu.iota {dimensions = array<i32: 0>} : vector<32x128xi32>
      %13 = vector.broadcast %11 : i32 to vector<32x128xi32>
      %14 = arith.addi %13, %12 : vector<32x128xi32>
      %c0 = arith.constant 0 : index
      %c0_3 = arith.constant 0 : index
      %15 = vector.load %arg5[%c0, %c0_3] : memref<1x128xi32, #tpu.memory_space<vmem>>, vector<1x128xi32>
      %16 = vector.broadcast %15 : vector<1x128xi32> to vector<32x128xi32>
      %17 = arith.cmpi eq, %14, %16 : vector<32x128xi32>
      %cst = arith.constant 0.000000e+00 : f32
      %cst_4 = arith.constant -1.000000e+30 : f32
      %18 = vector.broadcast %cst : f32 to vector<32x128xf32>
      %19 = vector.broadcast %cst_4 : f32 to vector<32x128xf32>
      %20 = arith.select %17, %18, %19 : vector<32x128xi1>, vector<32x128xf32>
      %c0_5 = arith.constant 0 : index
      %c0_6 = arith.constant 0 : index
      %21 = vector.load %arg6[%c0_5, %c0_6] : memref<128x32xf32, #tpu.memory_space<vmem>>, vector<128x32xf32>
      %c0_7 = arith.constant 0 : index
      %c0_8 = arith.constant 0 : index
      %22 = vector.load %arg7[%c0_7, %c0_8] : memref<128x32xf32, #tpu.memory_space<vmem>>, vector<128x32xf32>
      %c0_9 = arith.constant 0 : index
      %c0_10 = arith.constant 0 : index
      %c0_11 = arith.constant 0 : index
      %23 = vector.load %arg11[%c0_9, %c0_10, %c0_11] : memref<2x32x16xf32, #tpu.memory_space<vmem>>, vector<1x32x16xf32>
      %24 = vector.shape_cast %23 : vector<1x32x16xf32> to vector<32x16xf32>
      %25 = vector.extract_strided_slice %21 {offsets = [0, 0], sizes = [128, 16], strides = [1, 1]} : vector<128x32xf32> to vector<128x16xf32>
      %26 = vector.extract_strided_slice %22 {offsets = [0, 0], sizes = [128, 16], strides = [1, 1]} : vector<128x32xf32> to vector<128x16xf32>
      %cst_12 = arith.constant dense<0.000000e+00> : vector<32x128xf32>
      %27 = tpu.matmul %24, %25, %cst_12 {dimension_numbers = #tpu.dot_dimension_numbers<[1], [1], [0], [0], [0, 0, 1, 0], [], []>} : vector<32x16xf32>, vector<128x16xf32>, vector<32x128xf32> -> vector<32x128xf32>
      %28 = arith.addf %27, %20 : vector<32x128xf32>
      %c0_13 = arith.constant 0 : index
      %c0_14 = arith.constant 0 : index
      %c0_15 = arith.constant 0 : index
      %29 = vector.load %arg13[%c0_13, %c0_14, %c0_15] : memref<2x32x1xf32, #tpu.memory_space<vmem>>, vector<1x32x1xf32>
      %30 = vector.shape_cast %29 : vector<1x32x1xf32> to vector<32x1xf32>
      %cst_16 = arith.constant dense<0xFF800000> : vector<32xf32>
      %31 = vector.multi_reduction <maximumf>, %28, %cst_16 [1] : vector<32x128xf32> to vector<32xf32>
      %32 = vector.shape_cast %31 : vector<32xf32> to vector<32x1xf32>
      %33 = arith.maximumf %30, %32 : vector<32x1xf32>
      %34 = arith.subf %30, %33 : vector<32x1xf32>
      %35 = math.exp %34 : vector<32x1xf32>
      %36 = vector.broadcast %33 : vector<32x1xf32> to vector<32x128xf32>
      %37 = arith.subf %28, %36 : vector<32x128xf32>
      %38 = math.exp %37 : vector<32x128xf32>
      %cst_17 = arith.constant 0.000000e+00 : f32
      %39 = vector.broadcast %cst_17 : f32 to vector<32x128xf32>
      %40 = arith.select %17, %38, %39 : vector<32x128xi1>, vector<32x128xf32>
      %c0_18 = arith.constant 0 : index
      %c0_19 = arith.constant 0 : index
      %c0_20 = arith.constant 0 : index
      %41 = vector.load %arg14[%c0_18, %c0_19, %c0_20] : memref<2x32x1xf32, #tpu.memory_space<vmem>>, vector<1x32x1xf32>
      %42 = vector.shape_cast %41 : vector<1x32x1xf32> to vector<32x1xf32>
      %43 = arith.mulf %35, %42 : vector<32x1xf32>
      %cst_21 = arith.constant dense<0.000000e+00> : vector<32xf32>
      %44 = vector.multi_reduction <add>, %40, %cst_21 [1] : vector<32x128xf32> to vector<32xf32>
      %45 = vector.shape_cast %44 : vector<32xf32> to vector<32x1xf32>
      %46 = arith.addf %43, %45 : vector<32x1xf32>
      %c0_22 = arith.constant 0 : index
      %c0_23 = arith.constant 0 : index
      %c0_24 = arith.constant 0 : index
      %47 = vector.load %arg14[%c0_22, %c0_23, %c0_24] : memref<2x32x1xf32, #tpu.memory_space<vmem>>, vector<1x32x1xf32>
      %48 = vector.shape_cast %47 : vector<1x32x1xf32> to vector<32x1xf32>
      %49 = vector.shape_cast %46 : vector<32x1xf32> to vector<1x32x1xf32>
      tpu.vector_store %arg14[%c0_22, %c0_23, %c0_24], %49 {strides = array<i32>} : memref<2x32x1xf32, #tpu.memory_space<vmem>>, vector<1x32x1xf32>,
      %c0_25 = arith.constant 0 : index
      %c0_26 = arith.constant 0 : index
      %c0_27 = arith.constant 0 : index
      %50 = vector.load %arg15[%c0_25, %c0_26, %c0_27] : memref<2x32x16xf32, #tpu.memory_space<vmem>>, vector<1x32x16xf32>
      %51 = vector.shape_cast %50 : vector<1x32x16xf32> to vector<32x16xf32>
      %52 = vector.broadcast %35 : vector<32x1xf32> to vector<32x16xf32>
      %53 = arith.mulf %52, %51 : vector<32x16xf32>
      %cst_28 = arith.constant dense<0.000000e+00> : vector<32x16xf32>
      %54 = tpu.matmul %40, %26, %cst_28 {dimension_numbers = #tpu.dot_dimension_numbers<[1], [0], [0], [1], [0, 0, 1, 1], [], []>} : vector<32x128xf32>, vector<128x16xf32>, vector<32x16xf32> -> vector<32x16xf32>
      %55 = arith.addf %53, %54 : vector<32x16xf32>
      %c0_29 = arith.constant 0 : index
      %c0_30 = arith.constant 0 : index
      %c0_31 = arith.constant 0 : index
      %56 = vector.load %arg15[%c0_29, %c0_30, %c0_31] : memref<2x32x16xf32, #tpu.memory_space<vmem>>, vector<1x32x16xf32>
      %57 = vector.shape_cast %56 : vector<1x32x16xf32> to vector<32x16xf32>
      %58 = vector.shape_cast %55 : vector<32x16xf32> to vector<1x32x16xf32>
      tpu.vector_store %arg15[%c0_29, %c0_30, %c0_31], %58 {strides = array<i32>} : memref<2x32x16xf32, #tpu.memory_space<vmem>>, vector<1x32x16xf32>,
      %c0_32 = arith.constant 0 : index
      %c0_33 = arith.constant 0 : index
      %c0_34 = arith.constant 0 : index
      %59 = vector.load %arg13[%c0_32, %c0_33, %c0_34] : memref<2x32x1xf32, #tpu.memory_space<vmem>>, vector<1x32x1xf32>
      %60 = vector.shape_cast %59 : vector<1x32x1xf32> to vector<32x1xf32>
      %61 = vector.shape_cast %33 : vector<32x1xf32> to vector<1x32x1xf32>
      tpu.vector_store %arg13[%c0_32, %c0_33, %c0_34], %61 {strides = array<i32>} : memref<2x32x1xf32, #tpu.memory_space<vmem>>, vector<1x32x1xf32>,
      %c1 = arith.constant 1 : index
      %c0_35 = arith.constant 0 : index
      %c0_36 = arith.constant 0 : index
      %62 = vector.load %arg11[%c1, %c0_35, %c0_36] : memref<2x32x16xf32, #tpu.memory_space<vmem>>, vector<1x32x16xf32>
      %63 = vector.shape_cast %62 : vector<1x32x16xf32> to vector<32x16xf32>
      %64 = vector.extract_strided_slice %21 {offsets = [0, 16], sizes = [128, 16], strides = [1, 1]} : vector<128x32xf32> to vector<128x16xf32>
      %65 = vector.extract_strided_slice %22 {offsets = [0, 16], sizes = [128, 16], strides = [1, 1]} : vector<128x32xf32> to vector<128x16xf32>
      %cst_37 = arith.constant dense<0.000000e+00> : vector<32x128xf32>
      %66 = tpu.matmul %63, %64, %cst_37 {dimension_numbers = #tpu.dot_dimension_numbers<[1], [1], [0], [0], [0, 0, 1, 0], [], []>} : vector<32x16xf32>, vector<128x16xf32>, vector<32x128xf32> -> vector<32x128xf32>
      %67 = arith.addf %66, %20 : vector<32x128xf32>
      %c1_38 = arith.constant 1 : index
      %c0_39 = arith.constant 0 : index
      %c0_40 = arith.constant 0 : index
      %68 = vector.load %arg13[%c1_38, %c0_39, %c0_40] : memref<2x32x1xf32, #tpu.memory_space<vmem>>, vector<1x32x1xf32>
      %69 = vector.shape_cast %68 : vector<1x32x1xf32> to vector<32x1xf32>
      %cst_41 = arith.constant dense<0xFF800000> : vector<32xf32>
      %70 = vector.multi_reduction <maximumf>, %67, %cst_41 [1] : vector<32x128xf32> to vector<32xf32>
      %71 = vector.shape_cast %70 : vector<32xf32> to vector<32x1xf32>
      %72 = arith.maximumf %69, %71 : vector<32x1xf32>
      %73 = arith.subf %69, %72 : vector<32x1xf32>
      %74 = math.exp %73 : vector<32x1xf32>
      %75 = vector.broadcast %72 : vector<32x1xf32> to vector<32x128xf32>
      %76 = arith.subf %67, %75 : vector<32x128xf32>
      %77 = math.exp %76 : vector<32x128xf32>
      %cst_42 = arith.constant 0.000000e+00 : f32
      %78 = vector.broadcast %cst_42 : f32 to vector<32x128xf32>
      %79 = arith.select %17, %77, %78 : vector<32x128xi1>, vector<32x128xf32>
      %c1_43 = arith.constant 1 : index
      %c0_44 = arith.constant 0 : index
      %c0_45 = arith.constant 0 : index
      %80 = vector.load %arg14[%c1_43, %c0_44, %c0_45] : memref<2x32x1xf32, #tpu.memory_space<vmem>>, vector<1x32x1xf32>
      %81 = vector.shape_cast %80 : vector<1x32x1xf32> to vector<32x1xf32>
      %82 = arith.mulf %74, %81 : vector<32x1xf32>
      %cst_46 = arith.constant dense<0.000000e+00> : vector<32xf32>
      %83 = vector.multi_reduction <add>, %79, %cst_46 [1] : vector<32x128xf32> to vector<32xf32>
      %84 = vector.shape_cast %83 : vector<32xf32> to vector<32x1xf32>
      %85 = arith.addf %82, %84 : vector<32x1xf32>
      %c1_47 = arith.constant 1 : index
      %c0_48 = arith.constant 0 : index
      %c0_49 = arith.constant 0 : index
      %86 = vector.load %arg14[%c1_47, %c0_48, %c0_49] : memref<2x32x1xf32, #tpu.memory_space<vmem>>, vector<1x32x1xf32>
      %87 = vector.shape_cast %86 : vector<1x32x1xf32> to vector<32x1xf32>
      %88 = vector.shape_cast %85 : vector<32x1xf32> to vector<1x32x1xf32>
      tpu.vector_store %arg14[%c1_47, %c0_48, %c0_49], %88 {strides = array<i32>} : memref<2x32x1xf32, #tpu.memory_space<vmem>>, vector<1x32x1xf32>,
      %c1_50 = arith.constant 1 : index
      %c0_51 = arith.constant 0 : index
      %c0_52 = arith.constant 0 : index
      %89 = vector.load %arg15[%c1_50, %c0_51, %c0_52] : memref<2x32x16xf32, #tpu.memory_space<vmem>>, vector<1x32x16xf32>
      %90 = vector.shape_cast %89 : vector<1x32x16xf32> to vector<32x16xf32>
      %91 = vector.broadcast %74 : vector<32x1xf32> to vector<32x16xf32>
      %92 = arith.mulf %91, %90 : vector<32x16xf32>
      %cst_53 = arith.constant dense<0.000000e+00> : vector<32x16xf32>
      %93 = tpu.matmul %79, %65, %cst_53 {dimension_numbers = #tpu.dot_dimension_numbers<[1], [0], [0], [1], [0, 0, 1, 1], [], []>} : vector<32x128xf32>, vector<128x16xf32>, vector<32x16xf32> -> vector<32x16xf32>
      %94 = arith.addf %92, %93 : vector<32x16xf32>
      %c1_54 = arith.constant 1 : index
      %c0_55 = arith.constant 0 : index
      %c0_56 = arith.constant 0 : index
      %95 = vector.load %arg15[%c1_54, %c0_55, %c0_56] : memref<2x32x16xf32, #tpu.memory_space<vmem>>, vector<1x32x16xf32>
      %96 = vector.shape_cast %95 : vector<1x32x16xf32> to vector<32x16xf32>
      %97 = vector.shape_cast %94 : vector<32x16xf32> to vector<1x32x16xf32>
      tpu.vector_store %arg15[%c1_54, %c0_55, %c0_56], %97 {strides = array<i32>} : memref<2x32x16xf32, #tpu.memory_space<vmem>>, vector<1x32x16xf32>,
      %c1_57 = arith.constant 1 : index
      %c0_58 = arith.constant 0 : index
      %c0_59 = arith.constant 0 : index
      %98 = vector.load %arg13[%c1_57, %c0_58, %c0_59] : memref<2x32x1xf32, #tpu.memory_space<vmem>>, vector<1x32x1xf32>
      %99 = vector.shape_cast %98 : vector<1x32x1xf32> to vector<32x1xf32>
      %100 = vector.shape_cast %72 : vector<32x1xf32> to vector<1x32x1xf32>
      tpu.vector_store %arg13[%c1_57, %c0_58, %c0_59], %100 {strides = array<i32>} : memref<2x32x1xf32, #tpu.memory_space<vmem>>, vector<1x32x1xf32>,
    } else {
    }
    %c1_i32 = arith.constant 1 : i32
    %8 = arith.cmpi eq, %arg1, %c1_i32 : i32
    %9 = arith.extui %8 : i1 to i32
    %c0_i32_2 = arith.constant 0 : i32
    %10 = arith.cmpi ne, %9, %c0_i32_2 : i32
    scf.if %10 {
      %c0 = arith.constant 0 : index
      %c0_3 = arith.constant 0 : index
      %c0_4 = arith.constant 0 : index
      %11 = vector.load %arg14[%c0, %c0_3, %c0_4] : memref<2x32x1xf32, #tpu.memory_space<vmem>>, vector<1x32x1xf32>
      %12 = vector.shape_cast %11 : vector<1x32x1xf32> to vector<32x1xf32>
      %cst = arith.constant 0.000000e+00 : f32
      %13 = vector.broadcast %cst : f32 to vector<32x1xf32>
      %14 = arith.cmpf ogt, %12, %13 : vector<32x1xf32>
      %cst_5 = arith.constant 1.000000e+00 : f32
      %15 = vector.broadcast %cst_5 : f32 to vector<32x1xf32>
      %16 = arith.divf %15, %12 : vector<32x1xf32>
      %cst_6 = arith.constant 0.000000e+00 : f32
      %17 = vector.broadcast %cst_6 : f32 to vector<32x1xf32>
      %18 = arith.select %14, %16, %17 : vector<32x1xi1>, vector<32x1xf32>
      %c0_7 = arith.constant 0 : index
      %c0_8 = arith.constant 0 : index
      %c0_9 = arith.constant 0 : index
      %19 = vector.load %arg15[%c0_7, %c0_8, %c0_9] : memref<2x32x16xf32, #tpu.memory_space<vmem>>, vector<1x32x16xf32>
      %20 = vector.shape_cast %19 : vector<1x32x16xf32> to vector<32x16xf32>
      %21 = vector.broadcast %18 : vector<32x1xf32> to vector<32x16xf32>
      %22 = arith.mulf %20, %21 : vector<32x16xf32>
      %c1 = arith.constant 1 : index
      %c0_10 = arith.constant 0 : index
      %c0_11 = arith.constant 0 : index
      %23 = vector.load %arg14[%c1, %c0_10, %c0_11] : memref<2x32x1xf32, #tpu.memory_space<vmem>>, vector<1x32x1xf32>
      %24 = vector.shape_cast %23 : vector<1x32x1xf32> to vector<32x1xf32>
      %cst_12 = arith.constant 0.000000e+00 : f32
      %25 = vector.broadcast %cst_12 : f32 to vector<32x1xf32>
      %26 = arith.cmpf ogt, %24, %25 : vector<32x1xf32>
      %cst_13 = arith.constant 1.000000e+00 : f32
      %27 = vector.broadcast %cst_13 : f32 to vector<32x1xf32>
      %28 = arith.divf %27, %24 : vector<32x1xf32>
      %cst_14 = arith.constant 0.000000e+00 : f32
      %29 = vector.broadcast %cst_14 : f32 to vector<32x1xf32>
      %30 = arith.select %26, %28, %29 : vector<32x1xi1>, vector<32x1xf32>
      %c1_15 = arith.constant 1 : index
      %c0_16 = arith.constant 0 : index
      %c0_17 = arith.constant 0 : index
      %31 = vector.load %arg15[%c1_15, %c0_16, %c0_17] : memref<2x32x16xf32, #tpu.memory_space<vmem>>, vector<1x32x16xf32>
      %32 = vector.shape_cast %31 : vector<1x32x16xf32> to vector<32x16xf32>
      %33 = vector.broadcast %30 : vector<32x1xf32> to vector<32x16xf32>
      %34 = arith.mulf %32, %33 : vector<32x16xf32>
      %35 = tpu.concatenate %22, %34 in 1 : vector<32x16xf32>, vector<32x16xf32> -> vector<32x32xf32>
      %c0_18 = arith.constant 0 : index
      %c0_19 = arith.constant 0 : index
      %36 = vector.load %arg12[%c0_18, %c0_19] : memref<32x32xf32, #tpu.memory_space<vmem>>, vector<32x32xf32>
      %37 = arith.addf %35, %36 : vector<32x32xf32>
      %c0_20 = arith.constant 0 : index
      %c0_21 = arith.constant 0 : index
      %38 = vector.load %arg10[%c0_20, %c0_21] : memref<32x32xf32, #tpu.memory_space<vmem>>, vector<32x32xf32>
      tpu.vector_store %arg10[%c0_20, %c0_21], %37 {strides = array<i32>} : memref<32x32xf32, #tpu.memory_space<vmem>>, vector<32x32xf32>,
    } else {
    }
    return
  }
  func.func @transform_0(%arg0: i32, %arg1: i32, %arg2: memref<2xi32, #tpu.memory_space<smem>>, %arg3: memref<2xi32, #tpu.memory_space<smem>>) -> (i32, i32) {
    %c0_i32 = arith.constant 0 : i32
    %c0_i32_0 = arith.constant 0 : i32
    return %arg0, %c0_i32 : i32, i32
  }
  func.func @transform_1(%arg0: i32, %arg1: i32, %arg2: memref<2xi32, #tpu.memory_space<smem>>, %arg3: memref<2xi32, #tpu.memory_space<smem>>) -> (i32, i32) {
    %0 = arith.index_cast %arg0 : i32 to index
    %1 = memref.load %arg3[%0] : memref<2xi32, #tpu.memory_space<smem>>
    %c1_i32 = arith.constant 1 : i32
    %2 = arith.subi %1, %c1_i32 : i32
    %c0_i32 = arith.constant 0 : i32
    %3 = arith.maxsi %2, %c0_i32 : i32
    %4 = arith.minsi %arg1, %3 : i32
    %5 = arith.index_cast %arg0 : i32 to index
    %6 = memref.load %arg2[%5] : memref<2xi32, #tpu.memory_space<smem>>
    %7 = arith.addi %6, %4 : i32
    %c0_i32_0 = arith.constant 0 : i32
    %c0_i32_1 = arith.constant 0 : i32
    return %c0_i32_0, %7 : i32, i32
  }
  func.func @transform_2(%arg0: i32, %arg1: i32, %arg2: memref<2xi32, #tpu.memory_space<smem>>, %arg3: memref<2xi32, #tpu.memory_space<smem>>) -> (i32, i32) {
    %0 = arith.index_cast %arg0 : i32 to index
    %1 = memref.load %arg3[%0] : memref<2xi32, #tpu.memory_space<smem>>
    %c1_i32 = arith.constant 1 : i32
    %2 = arith.subi %1, %c1_i32 : i32
    %c0_i32 = arith.constant 0 : i32
    %3 = arith.maxsi %2, %c0_i32 : i32
    %4 = arith.minsi %arg1, %3 : i32
    %5 = arith.index_cast %arg0 : i32 to index
    %6 = memref.load %arg2[%5] : memref<2xi32, #tpu.memory_space<smem>>
    %7 = arith.addi %6, %4 : i32
    %c0_i32_0 = arith.constant 0 : i32
    %c0_i32_1 = arith.constant 0 : i32
    return %7, %c0_i32_0 : i32, i32
  }
  func.func @transform_3(%arg0: i32, %arg1: i32, %arg2: memref<2xi32, #tpu.memory_space<smem>>, %arg3: memref<2xi32, #tpu.memory_space<smem>>) -> (i32, i32) {
    %0 = arith.index_cast %arg0 : i32 to index
    %1 = memref.load %arg3[%0] : memref<2xi32, #tpu.memory_space<smem>>
    %c1_i32 = arith.constant 1 : i32
    %2 = arith.subi %1, %c1_i32 : i32
    %c0_i32 = arith.constant 0 : i32
    %3 = arith.maxsi %2, %c0_i32 : i32
    %4 = arith.minsi %arg1, %3 : i32
    %5 = arith.index_cast %arg0 : i32 to index
    %6 = memref.load %arg2[%5] : memref<2xi32, #tpu.memory_space<smem>>
    %7 = arith.addi %6, %4 : i32
    %c0_i32_0 = arith.constant 0 : i32
    %c0_i32_1 = arith.constant 0 : i32
    return %7, %c0_i32_0 : i32, i32
  }
  func.func @transform_4(%arg0: i32, %arg1: i32, %arg2: memref<2xi32, #tpu.memory_space<smem>>, %arg3: memref<2xi32, #tpu.memory_space<smem>>) -> (i32, i32) {
    %c0_i32 = arith.constant 0 : i32
    %c0_i32_0 = arith.constant 0 : i32
    %c0_i32_1 = arith.constant 0 : i32
    return %c0_i32, %c0_i32_0 : i32, i32
  }
  func.func @transform_5(%arg0: i32, %arg1: i32, %arg2: memref<2xi32, #tpu.memory_space<smem>>, %arg3: memref<2xi32, #tpu.memory_space<smem>>) -> (i32, i32) {
    %c0_i32 = arith.constant 0 : i32
    %c0_i32_0 = arith.constant 0 : i32
    %c0_i32_1 = arith.constant 0 : i32
    return %c0_i32, %c0_i32_0 : i32, i32
  }
  func.func @transform_6(%arg0: i32, %arg1: i32, %arg2: memref<2xi32, #tpu.memory_space<smem>>, %arg3: memref<2xi32, #tpu.memory_space<smem>>) -> (i32, i32) {
    %c0_i32 = arith.constant 0 : i32
    %c0_i32_0 = arith.constant 0 : i32
    return %arg0, %c0_i32 : i32, i32
  }
}

</mosaic_0001>

<llo_original>
// kernel: tpu_custom_call.1
$region0: #{tpu_custom_call.1}
  #allocation0 [shape = 'u32[]', space=smem, size = 0x4, offset = 0x4, fixed_abs, tag = 'smem constant byte address 0x4 - core index']
  #allocation1 [shape = 'u32[144,128]{1,0:T(1,128)}', space=vmem, size = 0x12000, scoped, tag = 'internal scratch']
  #allocation2 [shape = 'f32[2,32,16]{2,1,0:T(8,128)}', space=vmem, size = 0x8000, scoped, tag = 'scratch operand']
  #allocation3 [shape = 'f32[32,32]{1,0:T(8,128)}', space=vmem, size = 0x4000, scoped, tag = 'scratch operand']
  #allocation4 [shape = 'f32[2,32,1]{2,1,0:T(8,128)}', space=vmem, size = 0x8000, scoped, tag = 'scratch operand']
  #allocation5 [shape = 'f32[2,32,1]{2,1,0:T(8,128)}', space=vmem, size = 0x8000, scoped, tag = 'scratch operand']
  #allocation6 [shape = 'f32[2,32,16]{2,1,0:T(8,128)}', space=vmem, size = 0x8000, scoped, tag = 'scratch operand']
  #allocation7 [shape = 's32[1]{0}', space=sflag, size = 0x4, scoped, tag = 'scoped memory for tpu_custom_call.1']
  #allocation8 [shape = 'u8[512]{0}', space=smem, size = 0x200, scoped, tag = 'prefetched SMEM operand 0']
  #allocation9 [shape = 'u8[512]{0}', space=smem, size = 0x200, scoped, tag = 'prefetched SMEM operand 1']
  %s0 = inlined_call_operand.vmem [shape: s32[2], index: 0, kind: input, shape index: {}]
  %s1 = inlined_call_operand.vmem [shape: s32[2], index: 1, kind: input, shape index: {}]
  %s2 = inlined_call_operand.vmem [shape: f32[64,32], index: 2, kind: input, shape index: {}]
  %s3 = inlined_call_operand.vmem [shape: s32[1,256], index: 3, kind: input, shape index: {}]
  %s4 = inlined_call_operand.vmem [shape: f32[256,32], index: 4, kind: input, shape index: {}]
  %s5 = inlined_call_operand.vmem [shape: f32[256,32], index: 5, kind: input, shape index: {}]
  %s6 = inlined_call_operand.vmem [shape: f32[32,64], index: 6, kind: input, shape index: {}]
  %s7 = inlined_call_operand.vmem [shape: f32[1,64], index: 7, kind: input, shape index: {}]
  %s8 = inlined_call_operand.vmem [shape: f32[64,32], index: 8, kind: output, shape index: {}]
  %s9 = sld [smem:[#allocation0]]
  $region69: #{tpu_custom_call.1} parent=0
    _
  %s11 = ssub.s32 1, %s9
  %s12 = scalar_select 0, %s11, %s9
  %s13 = sshll.u32 %s0, 4
  %s14 = int_to_ptr.vmem [resolvable:$true] %s13
  %16 = dma.vmem_to_smem %s14, 16, [#allocation8], [#allocation7]
  %s17 = sshll.u32 %s1, 4
  %s18 = int_to_ptr.vmem [resolvable:$true] %s17
  %20 = dma.vmem_to_smem %s18, 16, [#allocation9], [#allocation7]
  %21 = dma.done [#allocation7], 32
  %22 = sfence
  loop: start=0, step=1, limit=6
  $region2: #{tpu_custom_call.1} parent=0 // loop_pre_header
    _
  $region3: #{tpu_custom_call.1} parent=0 // loop_header
    %s24 = sphi 0, %s28
    %p25 = scmp.ge.s32.totalorder %s24, 6
    %s31 = sphi 0, %s43
    %s32 = sphi 0, %s39
    %s33 = sphi 0, %s31
    %s34 = sphi 0, %s32
    %s35 = sphi 0, %s33
    %s36 = sphi 0, %s34
    %s46 = sphi 0, %s48
    %s49 = sphi 0, %s46
    %s50 = sphi 0, %s49
    %s66 = sphi 0, %s50
    %s88 = sphi 0, %s90
    %s91 = sphi 0, %s88
    %s92 = sphi 0, %s91
    %s108 = sphi 0, %s92
    %s130 = sphi 0, %s132
    %s133 = sphi 0, %s130
    %s134 = sphi 0, %s133
    %s150 = sphi 0, %s134
    %s172 = sphi 0, %s174
    %s175 = sphi 0, %s172
    %s176 = sphi 0, %s175
    %s192 = sphi 0, %s176
    %s196 = sphi 0, %s196
    %s198 = sphi 0, %s196
    %s199 = sphi 0, %s198
    %s213 = sphi 0, %s199
    %s217 = sphi 0, %s217
    %s219 = sphi 0, %s217
    %s220 = sphi 0, %s219
    %s234 = sphi 0, %s220
    %s240 = sphi 0, %s242
    %s243 = sphi 0, %s240
    %s244 = sphi 0, %s243
    %s260 = sphi 0, %s244
  $region4: #{tpu_custom_call.1} parent=0 // loop_header_branch
    %27 = sbr.rel (%p25) target = $region8
  $region5: #{tpu_custom_call.1} parent=0 // loop_body
    %s29 = ssub.s32 %s24, 1
    %s30 = ssub.s32 %s24, 2
    %s37 = sadd.s32 1, %s32
    %p38 = scmp.ge.s32.totalorder %s37, 2
    %s39 = scalar_select %p38, 0, %s37
    %s40 = sadd.s32 1, %s31
    %s41 = scalar_select %p38, %s40, %s31
    %p42 = scmp.ge.s32.totalorder %s41, 2
    %s43 = scalar_select %p42, 0, %s41
    %s44 = ssub.s32 %s31, %s43
    %p45 = scmp.eq.s32.totalorder %s44, 0
    %s47 = sadd.s32 %s46, 1
    %s48 = scalar_select %p45, %s46, %s47
    %p51 = pneg %p45
    %p52 = scmp.eq.s32.totalorder %s24, 3
    %p53 = por %p51, %p52
    %p54 = scmp.ne.s32.totalorder %s46, %s49
    %p55 = scmp.eq.s32.totalorder %s24, 0
    %p56 = por %p54, %p55
    %p57 = scmp.ne.s32.totalorder %s46, %s49
    %p58 = scmp.eq.s32.totalorder %s29, 3
    %p59 = por %p57, %p58
    %p60 = scmp.ne.s32.totalorder %s49, %s50
    %p61 = scmp.eq.s32.totalorder %s29, 0
    %p62 = por %p60, %p61
    %p63 = scmp.ne.s32.totalorder %s49, %s50
    %p64 = scmp.eq.s32.totalorder %s30, 3
    %p65 = por %p63, %p64
    %p67 = scmp.ne.s32.totalorder %s50, %s66
    %p68 = scmp.eq.s32.totalorder %s30, 0
    %p69 = por %p67, %p68
    %s70 = sld [smem:[#allocation9 + %s31]]
    %s71 = ssub.s32 %s70, 1
    %p72 = scmp.gt.s32.totalorder %s71, 0
    %s73 = scalar_select %p72, %s71, 0
    %p74 = scmp.lt.s32.totalorder %s32, %s73
    %s75 = scalar_select %p74, %s32, %s73
    %s76 = sld [smem:[#allocation8 + %s31]]
    %s77 = sadd.s32 %s76, %s75
    %s78 = sld [smem:[#allocation9 + %s43]]
    %s79 = ssub.s32 %s78, 1
    %p80 = scmp.gt.s32.totalorder %s79, 0
    %s81 = scalar_select %p80, %s79, 0
    %p82 = scmp.lt.s32.totalorder %s39, %s81
    %s83 = scalar_select %p82, %s39, %s81
    %s84 = sld [smem:[#allocation8 + %s43]]
    %s85 = sadd.s32 %s84, %s83
    %s86 = ssub.s32 %s77, %s85
    %p87 = scmp.eq.s32.totalorder %s86, 0
    %s89 = sadd.s32 %s88, 1
    %s90 = scalar_select %p87, %s88, %s89
    %p93 = pneg %p87
    %p94 = scmp.eq.s32.totalorder %s24, 3
    %p95 = por %p93, %p94
    %p96 = scmp.ne.s32.totalorder %s88, %s91
    %p97 = scmp.eq.s32.totalorder %s24, 0
    %p98 = por %p96, %p97
    %p99 = scmp.ne.s32.totalorder %s88, %s91
    %p100 = scmp.eq.s32.totalorder %s29, 3
    %p101 = por %p99, %p100
    %p102 = scmp.ne.s32.totalorder %s91, %s92
    %p103 = scmp.eq.s32.totalorder %s29, 0
    %p104 = por %p102, %p103
    %p105 = scmp.ne.s32.totalorder %s91, %s92
    %p106 = scmp.eq.s32.totalorder %s30, 3
    %p107 = por %p105, %p106
    %p109 = scmp.ne.s32.totalorder %s92, %s108
    %p110 = scmp.eq.s32.totalorder %s30, 0
    %p111 = por %p109, %p110
    %s112 = sld [smem:[#allocation9 + %s31]]
    %s113 = ssub.s32 %s112, 1
    %p114 = scmp.gt.s32.totalorder %s113, 0
    %s115 = scalar_select %p114, %s113, 0
    %p116 = scmp.lt.s32.totalorder %s32, %s115
    %s117 = scalar_select %p116, %s32, %s115
    %s118 = sld [smem:[#allocation8 + %s31]]
    %s119 = sadd.s32 %s118, %s117
    %s120 = sld [smem:[#allocation9 + %s43]]
    %s121 = ssub.s32 %s120, 1
    %p122 = scmp.gt.s32.totalorder %s121, 0
    %s123 = scalar_select %p122, %s121, 0
    %p124 = scmp.lt.s32.totalorder %s39, %s123
    %s125 = scalar_select %p124, %s39, %s123
    %s126 = sld [smem:[#allocation8 + %s43]]
    %s127 = sadd.s32 %s126, %s125
    %s128 = ssub.s32 %s119, %s127
    %p129 = scmp.eq.s32.totalorder %s128, 0
    %s131 = sadd.s32 %s130, 1
    %s132 = scalar_select %p129, %s130, %s131
    %p135 = pneg %p129
    %p136 = scmp.eq.s32.totalorder %s24, 3
    %p137 = por %p135, %p136
    %p138 = scmp.ne.s32.totalorder %s130, %s133
    %p139 = scmp.eq.s32.totalorder %s24, 0
    %p140 = por %p138, %p139
    %p141 = scmp.ne.s32.totalorder %s130, %s133
    %p142 = scmp.eq.s32.totalorder %s29, 3
    %p143 = por %p141, %p142
    %p144 = scmp.ne.s32.totalorder %s133, %s134
    %p145 = scmp.eq.s32.totalorder %s29, 0
    %p146 = por %p144, %p145
    %p147 = scmp.ne.s32.totalorder %s133, %s134
    %p148 = scmp.eq.s32.totalorder %s30, 3
    %p149 = por %p147, %p148
    %p151 = scmp.ne.s32.totalorder %s134, %s150
    %p152 = scmp.eq.s32.totalorder %s30, 0
    %p153 = por %p151, %p152
    %s154 = sld [smem:[#allocation9 + %s31]]
    %s155 = ssub.s32 %s154, 1
    %p156 = scmp.gt.s32.totalorder %s155, 0
    %s157 = scalar_select %p156, %s155, 0
    %p158 = scmp.lt.s32.totalorder %s32, %s157
    %s159 = scalar_select %p158, %s32, %s157
    %s160 = sld [smem:[#allocation8 + %s31]]
    %s161 = sadd.s32 %s160, %s159
    %s162 = sld [smem:[#allocation9 + %s43]]
    %s163 = ssub.s32 %s162, 1
    %p164 = scmp.gt.s32.totalorder %s163, 0
    %s165 = scalar_select %p164, %s163, 0
    %p166 = scmp.lt.s32.totalorder %s39, %s165
    %s167 = scalar_select %p166, %s39, %s165
    %s168 = sld [smem:[#allocation8 + %s43]]
    %s169 = sadd.s32 %s168, %s167
    %s170 = ssub.s32 %s161, %s169
    %p171 = scmp.eq.s32.totalorder %s170, 0
    %s173 = sadd.s32 %s172, 1
    %s174 = scalar_select %p171, %s172, %s173
    %p177 = pneg %p171
    %p178 = scmp.eq.s32.totalorder %s24, 3
    %p179 = por %p177, %p178
    %p180 = scmp.ne.s32.totalorder %s172, %s175
    %p181 = scmp.eq.s32.totalorder %s24, 0
    %p182 = por %p180, %p181
    %p183 = scmp.ne.s32.totalorder %s172, %s175
    %p184 = scmp.eq.s32.totalorder %s29, 3
    %p185 = por %p183, %p184
    %p186 = scmp.ne.s32.totalorder %s175, %s176
    %p187 = scmp.eq.s32.totalorder %s29, 0
    %p188 = por %p186, %p187
    %p189 = scmp.ne.s32.totalorder %s175, %s176
    %p190 = scmp.eq.s32.totalorder %s30, 3
    %p191 = por %p189, %p190
    %p193 = scmp.ne.s32.totalorder %s176, %s192
    %p194 = scmp.eq.s32.totalorder %s30, 0
    %p195 = por %p193, %p194
    %s197 = sadd.s32 %s196, 1
    %p200 = scmp.eq.s32.totalorder %s24, 3
    %p201 = scmp.ne.s32.totalorder %s196, %s198
    %p202 = scmp.eq.s32.totalorder %s24, 0
    %p203 = por %p201, %p202
    %p204 = scmp.ne.s32.totalorder %s196, %s198
    %p205 = scmp.eq.s32.totalorder %s29, 3
    %p206 = por %p204, %p205
    %p207 = scmp.ne.s32.totalorder %s198, %s199
    %p208 = scmp.eq.s32.totalorder %s29, 0
    %p209 = por %p207, %p208
    %p210 = scmp.ne.s32.totalorder %s198, %s199
    %p211 = scmp.eq.s32.totalorder %s30, 3
    %p212 = por %p210, %p211
    %p214 = scmp.ne.s32.totalorder %s199, %s213
    %p215 = scmp.eq.s32.totalorder %s30, 0
    %p216 = por %p214, %p215
    %s218 = sadd.s32 %s217, 1
    %p221 = scmp.eq.s32.totalorder %s24, 3
    %p222 = scmp.ne.s32.totalorder %s217, %s219
    %p223 = scmp.eq.s32.totalorder %s24, 0
    %p224 = por %p222, %p223
    %p225 = scmp.ne.s32.totalorder %s217, %s219
    %p226 = scmp.eq.s32.totalorder %s29, 3
    %p227 = por %p225, %p226
    %p228 = scmp.ne.s32.totalorder %s219, %s220
    %p229 = scmp.eq.s32.totalorder %s29, 0
    %p230 = por %p228, %p229
    %p231 = scmp.ne.s32.totalorder %s219, %s220
    %p232 = scmp.eq.s32.totalorder %s30, 3
    %p233 = por %p231, %p232
    %p235 = scmp.ne.s32.totalorder %s220, %s234
    %p236 = scmp.eq.s32.totalorder %s30, 0
    %p237 = por %p235, %p236
    %s238 = ssub.s32 %s31, %s43
    %p239 = scmp.eq.s32.totalorder %s238, 0
    %s241 = sadd.s32 %s240, 1
    %s242 = scalar_select %p239, %s240, %s241
    %p245 = pneg %p239
    %p246 = scmp.eq.s32.totalorder %s24, 3
    %p247 = por %p245, %p246
    %p248 = scmp.ne.s32.totalorder %s240, %s243
    %p249 = scmp.eq.s32.totalorder %s24, 0
    %p250 = por %p248, %p249
    %p251 = scmp.ne.s32.totalorder %s240, %s243
    %p252 = scmp.eq.s32.totalorder %s29, 3
    %p253 = por %p251, %p252
    %p254 = scmp.ne.s32.totalorder %s243, %s244
    %p255 = scmp.eq.s32.totalorder %s29, 0
    %p256 = por %p254, %p255
    %p257 = scmp.ne.s32.totalorder %s243, %s244
    %p258 = scmp.eq.s32.totalorder %s30, 3
    %p259 = por %p257, %p258
    %p261 = scmp.ne.s32.totalorder %s244, %s260
    %p262 = scmp.eq.s32.totalorder %s30, 0
    %p263 = por %p261, %p262
    %p264 = scmp.le.s32.totalorder 1, %s24
    %p265 = scmp.lt.s32.totalorder %s24, 5
    %p266 = pnand %p264, %p265
    %p267 = pneg %p266
    // Predicated region
    $region9: #{tpu_custom_call.1} parent=5 // pred_check
      _
    $region10: #{tpu_custom_call.1} parent=5 // pred_check_branch
      %269 = sbr.rel (%p266) target = $region12
    $region11: #{tpu_custom_call.1} parent=5 // pred_region
      %s270 = ssub.s32 %s24, 1
      // Predicated region
      $region13: #{tpu_custom_call.1} parent=11 // pred_check
        %p271 = pneg %p209
      $region14: #{tpu_custom_call.1} parent=11 // pred_check_branch
        %273 = sbr.rel (%p271) target = $region16
      $region15: #{tpu_custom_call.1} parent=11 // pred_region
        _
      $region16: #{tpu_custom_call.1} parent=11 // pred_fallthru
        _
      // Predicated region
      $region17: #{tpu_custom_call.1} parent=11 // pred_check
        %p274 = pneg %p230
      $region18: #{tpu_custom_call.1} parent=11 // pred_check_branch
        %276 = sbr.rel (%p274) target = $region20
      $region19: #{tpu_custom_call.1} parent=11 // pred_region
        _
      $region20: #{tpu_custom_call.1} parent=11 // pred_fallthru
        _
    $region12: #{tpu_custom_call.1} parent=5 // pred_fallthru
      _
    %p277 = scmp.lt.s32.totalorder %s24, 4
    // Predicated region
    $region21: #{tpu_custom_call.1} parent=5 // pred_check
      %p278 = pneg %p277
    $region22: #{tpu_custom_call.1} parent=5 // pred_check_branch
      %280 = sbr.rel (%p278) target = $region24
    $region23: #{tpu_custom_call.1} parent=5 // pred_region
      // Predicated region
      $region25: #{tpu_custom_call.1} parent=23 // pred_check
        %p281 = pneg %p56
      $region26: #{tpu_custom_call.1} parent=23 // pred_check_branch
        %283 = sbr.rel (%p281) target = $region28
      $region27: #{tpu_custom_call.1} parent=23 // pred_region
        %s284 = smul.u32 4, %s31
        %p285 = scmp.lt.s32.totalorder %s284, 7
        %s286 = scalar_select %p285, %s284, 7
        %s287 = smul.addr %s286, 8
        %s288 = scalar_lea.vmem %s2, %s287
        %s289 = smul.u32 4, %s31
      $region28: #{tpu_custom_call.1} parent=23 // pred_fallthru
        _
      // Predicated region
      $region29: #{tpu_custom_call.1} parent=23 // pred_check
        %p290 = pneg %p98
      $region30: #{tpu_custom_call.1} parent=23 // pred_check_branch
        %292 = sbr.rel (%p290) target = $region32
      $region31: #{tpu_custom_call.1} parent=23 // pred_region
        %s293 = sld [smem:[#allocation9 + %s31]]
        %s294 = ssub.s32 %s293, 1
        %p295 = scmp.gt.s32.totalorder %s294, 0
        %s296 = scalar_select %p295, %s294, 0
        %p297 = scmp.lt.s32.totalorder %s32, %s296
        %s298 = scalar_select %p297, %s32, %s296
        %s299 = sld [smem:[#allocation8 + %s31]]
        %s300 = sadd.s32 %s299, %s298
        %p301 = scmp.lt.s32.totalorder %s300, 1
        %s302 = scalar_select %p301, %s300, 1
        %s303 = scalar_lea.vmem %s3, %s302
        %s304 = sld [smem:[#allocation9 + %s31]]
        %s305 = ssub.s32 %s304, 1
        %p306 = scmp.gt.s32.totalorder %s305, 0
        %s307 = scalar_select %p306, %s305, 0
        %p308 = scmp.lt.s32.totalorder %s32, %s307
        %s309 = scalar_select %p308, %s32, %s307
        %s310 = sld [smem:[#allocation8 + %s31]]
        %s311 = sadd.s32 %s310, %s309
      $region32: #{tpu_custom_call.1} parent=23 // pred_fallthru
        _
      // Predicated region
      $region33: #{tpu_custom_call.1} parent=23 // pred_check
        %p312 = pneg %p140
      $region34: #{tpu_custom_call.1} parent=23 // pred_check_branch
        %314 = sbr.rel (%p312) target = $region36
      $region35: #{tpu_custom_call.1} parent=23 // pred_region
        %s315 = sld [smem:[#allocation9 + %s31]]
        %s316 = ssub.s32 %s315, 1
        %p317 = scmp.gt.s32.totalorder %s316, 0
        %s318 = scalar_select %p317, %s316, 0
        %p319 = scmp.lt.s32.totalorder %s32, %s318
        %s320 = scalar_select %p319, %s32, %s318
        %s321 = sld [smem:[#allocation8 + %s31]]
        %s322 = sadd.s32 %s321, %s320
        %s323 = smul.u32 16, %s322
        %p324 = scmp.lt.s32.totalorder %s323, 31
        %s325 = scalar_select %p324, %s323, 31
        %s326 = smul.addr %s325, 8
        %s327 = scalar_lea.vmem %s4, %s326
        %s328 = sld [smem:[#allocation9 + %s31]]
        %s329 = ssub.s32 %s328, 1
        %p330 = scmp.gt.s32.totalorder %s329, 0
        %s331 = scalar_select %p330, %s329, 0
        %p332 = scmp.lt.s32.totalorder %s32, %s331
        %s333 = scalar_select %p332, %s32, %s331
        %s334 = sld [smem:[#allocation8 + %s31]]
        %s335 = sadd.s32 %s334, %s333
        %s336 = smul.u32 16, %s335
      $region36: #{tpu_custom_call.1} parent=23 // pred_fallthru
        _
      // Predicated region
      $region37: #{tpu_custom_call.1} parent=23 // pred_check
        %p337 = pneg %p182
      $region38: #{tpu_custom_call.1} parent=23 // pred_check_branch
        %339 = sbr.rel (%p337) target = $region40
      $region39: #{tpu_custom_call.1} parent=23 // pred_region
        %s340 = sld [smem:[#allocation9 + %s31]]
        %s341 = ssub.s32 %s340, 1
        %p342 = scmp.gt.s32.totalorder %s341, 0
        %s343 = scalar_select %p342, %s341, 0
        %p344 = scmp.lt.s32.totalorder %s32, %s343
        %s345 = scalar_select %p344, %s32, %s343
        %s346 = sld [smem:[#allocation8 + %s31]]
        %s347 = sadd.s32 %s346, %s345
        %s348 = smul.u32 16, %s347
        %p349 = scmp.lt.s32.totalorder %s348, 31
        %s350 = scalar_select %p349, %s348, 31
        %s351 = smul.addr %s350, 8
        %s352 = scalar_lea.vmem %s5, %s351
        %s353 = sld [smem:[#allocation9 + %s31]]
        %s354 = ssub.s32 %s353, 1
        %p355 = scmp.gt.s32.totalorder %s354, 0
        %s356 = scalar_select %p355, %s354, 0
        %p357 = scmp.lt.s32.totalorder %s32, %s356
        %s358 = scalar_select %p357, %s32, %s356
        %s359 = sld [smem:[#allocation8 + %s31]]
        %s360 = sadd.s32 %s359, %s358
        %s361 = smul.u32 16, %s360
      $region40: #{tpu_custom_call.1} parent=23 // pred_fallthru
        _
    $region24: #{tpu_custom_call.1} parent=5 // pred_fallthru
      _
    %p362 = scmp.le.s32.totalorder 1, %s24
    %p363 = scmp.lt.s32.totalorder %s24, 5
    %p364 = pnand %p362, %p363
    %p365 = pneg %p364
    // Predicated region
    $region41: #{tpu_custom_call.1} parent=5 // pred_check
      _
    $region42: #{tpu_custom_call.1} parent=5 // pred_check_branch
      %367 = sbr.rel (%p364) target = $region44
    $region43: #{tpu_custom_call.1} parent=5 // pred_region
      %s368 = ssub.s32 %s24, 1
      %s369 = smul.u32 4, %s33
      %p370 = scmp.lt.s32.totalorder %s369, 7
      %s371 = scalar_select %p370, %s369, 7
      %s372 = smul.addr %s371, 8
      %s373 = scalar_lea.vmem %s2, %s372
      %p374 = pneg %p62
      %p375 = pneg %p59
      %s376 = sld [smem:[#allocation9 + %s33]]
      %s377 = ssub.s32 %s376, 1
      %p378 = scmp.gt.s32.totalorder %s377, 0
      %s379 = scalar_select %p378, %s377, 0
      %p380 = scmp.lt.s32.totalorder %s34, %s379
      %s381 = scalar_select %p380, %s34, %s379
      %s382 = sld [smem:[#allocation8 + %s33]]
      %s383 = sadd.s32 %s382, %s381
      %p384 = scmp.lt.s32.totalorder %s383, 1
      %s385 = scalar_select %p384, %s383, 1
      %s386 = scalar_lea.vmem %s3, %s385
      %p387 = pneg %p104
      %p388 = pneg %p101
      %s389 = sld [smem:[#allocation9 + %s33]]
      %s390 = ssub.s32 %s389, 1
      %p391 = scmp.gt.s32.totalorder %s390, 0
      %s392 = scalar_select %p391, %s390, 0
      %p393 = scmp.lt.s32.totalorder %s34, %s392
      %s394 = scalar_select %p393, %s34, %s392
      %s395 = sld [smem:[#allocation8 + %s33]]
      %s396 = sadd.s32 %s395, %s394
      %s397 = smul.u32 16, %s396
      %p398 = scmp.lt.s32.totalorder %s397, 31
      %s399 = scalar_select %p398, %s397, 31
      %s400 = smul.addr %s399, 8
      %s401 = scalar_lea.vmem %s4, %s400
      %p402 = pneg %p146
      %p403 = pneg %p143
      %s404 = sld [smem:[#allocation9 + %s33]]
      %s405 = ssub.s32 %s404, 1
      %p406 = scmp.gt.s32.totalorder %s405, 0
      %s407 = scalar_select %p406, %s405, 0
      %p408 = scmp.lt.s32.totalorder %s34, %s407
      %s409 = scalar_select %p408, %s34, %s407
      %s410 = sld [smem:[#allocation8 + %s33]]
      %s411 = sadd.s32 %s410, %s409
      %s412 = smul.u32 16, %s411
      %p413 = scmp.lt.s32.totalorder %s412, 31
      %s414 = scalar_select %p413, %s412, 31
      %s415 = smul.addr %s414, 8
      %s416 = scalar_lea.vmem %s5, %s415
      %p417 = pneg %p188
      %p418 = pneg %p185
      %p419 = pneg %p209
      %p420 = pneg %p206
      %p421 = pneg %p230
      %p422 = pneg %p227
      %p423 = pneg %p256
      %p424 = pneg %p253
      %s425 = smul.u32 4, %s33
      %p426 = scmp.lt.s32.totalorder %s425, 7
      %s427 = scalar_select %p426, %s425, 7
      %s428 = smul.addr %s427, 8
      %s429 = scalar_lea.vmem %s8, %s428
      %s430 = smul.u32 4, %s33
      %p431 = scmp.lt.s32.totalorder %s430, 7
      %s432 = scalar_select %p431, %s430, 7
      %s433 = smul.addr %s432, 8
      %s434 = scalar_lea.vmem %s2, %s433
      %s435 = smul.u32 4, %s33
      %s436 = sld [smem:[#allocation9 + %s33]]
      %s437 = ssub.s32 %s436, 1
      %p438 = scmp.gt.s32.totalorder %s437, 0
      %s439 = scalar_select %p438, %s437, 0
      %p440 = scmp.lt.s32.totalorder %s34, %s439
      %s441 = scalar_select %p440, %s34, %s439
      %s442 = sld [smem:[#allocation8 + %s33]]
      %s443 = sadd.s32 %s442, %s441
      %p444 = scmp.lt.s32.totalorder %s443, 1
      %s445 = scalar_select %p444, %s443, 1
      %s446 = scalar_lea.vmem %s3, %s445
      %s447 = sld [smem:[#allocation9 + %s33]]
      %s448 = ssub.s32 %s447, 1
      %p449 = scmp.gt.s32.totalorder %s448, 0
      %s450 = scalar_select %p449, %s448, 0
      %p451 = scmp.lt.s32.totalorder %s34, %s450
      %s452 = scalar_select %p451, %s34, %s450
      %s453 = sld [smem:[#allocation8 + %s33]]
      %s454 = sadd.s32 %s453, %s452
      %s455 = sld [smem:[#allocation9 + %s33]]
      %s456 = ssub.s32 %s455, 1
      %p457 = scmp.gt.s32.totalorder %s456, 0
      %s458 = scalar_select %p457, %s456, 0
      %p459 = scmp.lt.s32.totalorder %s34, %s458
      %s460 = scalar_select %p459, %s34, %s458
      %s461 = sld [smem:[#allocation8 + %s33]]
      %s462 = sadd.s32 %s461, %s460
      %s463 = smul.u32 16, %s462
      %p464 = scmp.lt.s32.totalorder %s463, 31
      %s465 = scalar_select %p464, %s463, 31
      %s466 = smul.addr %s465, 8
      %s467 = scalar_lea.vmem %s4, %s466
      %s468 = sld [smem:[#allocation9 + %s33]]
      %s469 = ssub.s32 %s468, 1
      %p470 = scmp.gt.s32.totalorder %s469, 0
      %s471 = scalar_select %p470, %s469, 0
      %p472 = scmp.lt.s32.totalorder %s34, %s471
      %s473 = scalar_select %p472, %s34, %s471
      %s474 = sld [smem:[#allocation8 + %s33]]
      %s475 = sadd.s32 %s474, %s473
      %s476 = smul.u32 16, %s475
      %s477 = sld [smem:[#allocation9 + %s33]]
      %s478 = ssub.s32 %s477, 1
      %p479 = scmp.gt.s32.totalorder %s478, 0
      %s480 = scalar_select %p479, %s478, 0
      %p481 = scmp.lt.s32.totalorder %s34, %s480
      %s482 = scalar_select %p481, %s34, %s480
      %s483 = sld [smem:[#allocation8 + %s33]]
      %s484 = sadd.s32 %s483, %s482
      %s485 = smul.u32 16, %s484
      %p486 = scmp.lt.s32.totalorder %s485, 31
      %s487 = scalar_select %p486, %s485, 31
      %s488 = smul.addr %s487, 8
      %s489 = scalar_lea.vmem %s5, %s488
      %s490 = sld [smem:[#allocation9 + %s33]]
      %s491 = ssub.s32 %s490, 1
      %p492 = scmp.gt.s32.totalorder %s491, 0
      %s493 = scalar_select %p492, %s491, 0
      %p494 = scmp.lt.s32.totalorder %s34, %s493
      %s495 = scalar_select %p494, %s34, %s493
      %s496 = sld [smem:[#allocation8 + %s33]]
      %s497 = sadd.s32 %s496, %s495
      %s498 = smul.u32 16, %s497
      %s499 = smul.u32 4, %s33
      %p500 = scmp.lt.s32.totalorder %s499, 7
      %s501 = scalar_select %p500, %s499, 7
      %s502 = smul.addr %s501, 8
      %s503 = scalar_lea.vmem %s8, %s502
      %s504 = smul.u32 4, %s33
      %p505 = scmp.eq.s32.totalorder %s34, 0
      // Predicated region
      $region45: #{tpu_custom_call.1} parent=43 // pred_check
        %p506 = pneg %p505
      $region46: #{tpu_custom_call.1} parent=43 // pred_check_branch
        %508 = sbr.rel (%p506) target = $region48
      $region47: #{tpu_custom_call.1} parent=43 // pred_region
        %v509 = vld [vmem:[%s434] sm:$0xff]
        %v510 = vld [vmem:[%s434 + $0x8] sm:$0xff]
        %v511 = vld [vmem:[%s434 + $0x10] sm:$0xff]
        %v512 = vld [vmem:[%s434 + $0x18] sm:$0xff]
        %v513 = vld [vmem:[%s6] sm:$0xff]
        %v514 = vld [vmem:[%s6 + $0x8] sm:$0xff]
        %v515 = vld [vmem:[%s6 + $0x10] sm:$0xff]
        %v516 = vld [vmem:[%s6 + $0x18] sm:$0xff]
        %v517 = vld [vmem:[%s7] sm:$0x1]
        %v519 = vlaneseq
        %v520 = vshrl.u32 %v519, 7
        %v521 = vsub.s32 0, %v520
        %v522 = vrot.slane %v517, %v521
        %vm524 = vcmask 261120
        %v526 = vsel %vm524, %v509, 0
        %v529 = vsel %vm524, %v510, 0
        %v532 = vsel %vm524, %v511, 0
        %v535 = vsel %vm524, %v512, 0
        %537 = vmatprep.subr.mxu0 0.0
        %538 = vmatpush1.msra.mxu0 %v513
        %539 = vmatprep.subr.mxu0 0.0
        %540 = vmatpush1.msra.mxu0 %v514
        %541 = vmatprep.subr.mxu0 0.0
        %542 = vmatpush1.msra.mxu0 %v515
        %543 = vmatprep.subr.mxu0 0.0
        %544 = vmatpush1.msra.mxu0 %v516
        %545 = vmatprep.subr.mxu0 0.0
        %546 = vmatpush1.msra.mxu0 0.0
        %547 = vmatprep.subr.mxu0 0.0
        %548 = vmatpush1.msra.mxu0 0.0
        %549 = vmatprep.subr.mxu0 0.0
        %550 = vmatpush1.msra.mxu0 0.0
        %551 = vmatprep.subr.mxu0 0.0
        %552 = vmatpush1.msra.mxu0 0.0
        %553 = vmatprep.subr.mxu0 0.0
        %554 = vmatpush1.msra.mxu0 0.0
        %555 = vmatprep.subr.mxu0 0.0
        %556 = vmatpush1.msra.mxu0 0.0
        %557 = vmatprep.subr.mxu0 0.0
        %558 = vmatpush1.msra.mxu0 0.0
        %559 = vmatprep.subr.mxu0 0.0
        %560 = vmatpush1.msra.mxu0 0.0
        %561 = vmatprep.subr.mxu0 0.0
        %562 = vmatpush1.msra.mxu0 0.0
        %563 = vmatprep.subr.mxu0 0.0
        %564 = vmatpush1.msra.mxu0 0.0
        %565 = vmatprep.subr.mxu0 0.0
        %566 = vmatpush1.msra.mxu0 0.0
        %567 = vmatprep.subr.mxu0 0.0
        %568 = vmatpush1.msra.mxu0 0.0
        %569 = vmatprep.subr.mxu0 0.0
        %570 = vmatpush1.msra.mxu0 0.0
        %571 = vmatprep.subr.mxu0 0.0
        %572 = vmatpush1.msra.mxu0 0.0
        %573 = vmatprep.subr.mxu0 0.0
        %574 = vmatpush1.msra.mxu0 0.0
        %575 = vmatprep.subr.mxu0 0.0
        %576 = vmatpush1.msra.mxu0 0.0
        %577 = vmatprep.subr.mxu0 0.0
        %578 = vmatpush1.msra.mxu0 0.0
        %579 = vmatprep.subr.mxu0 0.0
        %580 = vmatpush1.msra.mxu0 0.0
        %581 = vmatprep.subr.mxu0 0.0
        %582 = vmatpush1.msra.mxu0 0.0
        %583 = vmatprep.subr.mxu0 0.0
        %584 = vmatpush1.msra.mxu0 0.0
        %585 = vmatprep.subr.mxu0 0.0
        %586 = vmatpush1.msra.mxu0 0.0
        %587 = vmatprep.subr.mxu0 0.0
        %588 = vmatpush1.msra.mxu0 0.0
        %589 = vmatprep.subr.mxu0 0.0
        %590 = vmatpush1.msra.mxu0 0.0
        %591 = vmatprep.subr.mxu0 0.0
        %592 = vmatpush1.msra.mxu0 0.0
        %593 = vmatprep.subr.mxu0 0.0
        %594 = vmatpush1.msra.mxu0 0.0
        %595 = vmatprep.subr.mxu0 0.0
        %596 = vmatpush1.msra.mxu0 0.0
        %597 = vmatprep.subr.mxu0 0.0
        %598 = vmatpush1.msra.mxu0 0.0
        %599 = vmatprep.subr.mxu0 0.0
        %600 = vmatpush1.msra.mxu0 0.0
        %601 = vmatprep.mubr.f32.mxu0 0.0
        %602 = vmatmul.mubr.f32.gmra.mrb[0].mxu0 %v526
        %v603 = vpop.f32.mrb[0].mxu0
        %v604 = vadd.f32 %v522, %v603
        %v605 = vpop.f32.mrb[0].mxu0
        %606 = vmatprep.mubr.f32.mxu0 0.0
        %607 = vmatmul.mubr.f32.gmra.mrb[0].mxu0 %v529
        %v608 = vpop.f32.mrb[0].mxu0
        %v609 = vadd.f32 %v522, %v608
        %v610 = vpop.f32.mrb[0].mxu0
        %611 = vmatprep.mubr.f32.mxu0 0.0
        %612 = vmatmul.mubr.f32.gmra.mrb[0].mxu0 %v532
        %v613 = vpop.f32.mrb[0].mxu0
        %v614 = vadd.f32 %v522, %v613
        %v615 = vpop.f32.mrb[0].mxu0
        %616 = vmatprep.mubr.f32.mxu0 0.0
        %617 = vmatmul.mubr.f32.gmra.mrb[0].mxu0 %v535
        %v618 = vpop.f32.mrb[0].mxu0
        %v619 = vadd.f32 %v522, %v618
        %v620 = vpop.f32.mrb[0].mxu0
        %621 = vdwg.mxu0
        %vm622 = vcmask 130048
        %623 = vst.msk [vmem:[#allocation2] sm:$0xff] %vm622, %v604
        %624 = vst.msk [vmem:[#allocation2 + $0x8] sm:$0xff] %vm622, %v609
        %625 = vst.msk [vmem:[#allocation2 + $0x10] sm:$0xff] %vm622, %v614
        %626 = vst.msk [vmem:[#allocation2 + $0x18] sm:$0xff] %vm622, %v619
        %631 = vrot.lane.b32.xlu0 %v604, 112
        %v632 = vpop.permute.xlu0 %631
        %633 = vrot.lane.b32.xlu0 %v609, 112
        %v634 = vpop.permute.xlu0 %633
        %635 = vrot.lane.b32.xlu0 %v614, 112
        %v636 = vpop.permute.xlu0 %635
        %637 = vrot.lane.b32.xlu0 %v619, 112
        %v638 = vpop.permute.xlu0 %637
        %s643 = scalar_lea.vmem [#allocation2], 32
        %644 = vst.msk [vmem:[%s643] sm:$0xff] %vm622, %v632
        %645 = vst.msk [vmem:[%s643 + $0x8] sm:$0xff] %vm622, %v634
        %646 = vst.msk [vmem:[%s643 + $0x10] sm:$0xff] %vm622, %v636
        %647 = vst.msk [vmem:[%s643 + $0x18] sm:$0xff] %vm622, %v638
        %648 = vrot.lane.b32.xlu0 %v604, 96
        %v649 = vpop.permute.xlu0 %648
        %650 = vrot.lane.b32.xlu0 %v609, 96
        %v651 = vpop.permute.xlu0 %650
        %652 = vrot.lane.b32.xlu0 %v614, 96
        %v653 = vpop.permute.xlu0 %652
        %654 = vrot.lane.b32.xlu0 %v619, 96
        %v655 = vpop.permute.xlu0 %654
        %660 = vst.msk [vmem:[#allocation3] sm:$0xff] %vm524, %v649
        %661 = vst.msk [vmem:[#allocation3 + $0x8] sm:$0xff] %vm524, %v651
        %662 = vst.msk [vmem:[#allocation3 + $0x10] sm:$0xff] %vm524, %v653
        %663 = vst.msk [vmem:[#allocation3 + $0x18] sm:$0xff] %vm524, %v655
        %vm664 = vcmask 7168
        %665 = vst.msk [vmem:[#allocation4] sm:$0xff] %vm664, -1e+30
        %666 = vst.msk [vmem:[#allocation4 + $0x8] sm:$0xff] %vm664, -1e+30
        %667 = vst.msk [vmem:[#allocation4 + $0x10] sm:$0xff] %vm664, -1e+30
        %668 = vst.msk [vmem:[#allocation4 + $0x18] sm:$0xff] %vm664, -1e+30
        %669 = vst.msk [vmem:[#allocation4 + $0x20] sm:$0xff] %vm664, -1e+30
        %670 = vst.msk [vmem:[#allocation4 + $0x28] sm:$0xff] %vm664, -1e+30
        %671 = vst.msk [vmem:[#allocation4 + $0x30] sm:$0xff] %vm664, -1e+30
        %672 = vst.msk [vmem:[#allocation4 + $0x38] sm:$0xff] %vm664, -1e+30
        %673 = vst.msk [vmem:[#allocation5] sm:$0xff] %vm664, 0.0
        %674 = vst.msk [vmem:[#allocation5 + $0x8] sm:$0xff] %vm664, 0.0
        %675 = vst.msk [vmem:[#allocation5 + $0x10] sm:$0xff] %vm664, 0.0
        %676 = vst.msk [vmem:[#allocation5 + $0x18] sm:$0xff] %vm664, 0.0
        %677 = vst.msk [vmem:[#allocation5 + $0x20] sm:$0xff] %vm664, 0.0
        %678 = vst.msk [vmem:[#allocation5 + $0x28] sm:$0xff] %vm664, 0.0
        %679 = vst.msk [vmem:[#allocation5 + $0x30] sm:$0xff] %vm664, 0.0
        %680 = vst.msk [vmem:[#allocation5 + $0x38] sm:$0xff] %vm664, 0.0
        %681 = vst.msk [vmem:[#allocation6] sm:$0xff] %vm622, 0.0
        %682 = vst.msk [vmem:[#allocation6 + $0x8] sm:$0xff] %vm622, 0.0
        %683 = vst.msk [vmem:[#allocation6 + $0x10] sm:$0xff] %vm622, 0.0
        %684 = vst.msk [vmem:[#allocation6 + $0x18] sm:$0xff] %vm622, 0.0
        %685 = vst.msk [vmem:[#allocation6 + $0x20] sm:$0xff] %vm622, 0.0
        %686 = vst.msk [vmem:[#allocation6 + $0x28] sm:$0xff] %vm622, 0.0
        %687 = vst.msk [vmem:[#allocation6 + $0x30] sm:$0xff] %vm622, 0.0
        %688 = vst.msk [vmem:[#allocation6 + $0x38] sm:$0xff] %vm622, 0.0
      $region48: #{tpu_custom_call.1} parent=43 // pred_fallthru
        _
      %s689 = sld [smem:[#allocation9 + %s33]]
      %p690 = scmp.lt.s32.totalorder %s34, %s689
      // Predicated region
      $region49: #{tpu_custom_call.1} parent=43 // pred_check
        %p691 = pneg %p690
      $region50: #{tpu_custom_call.1} parent=43 // pred_check_branch
        %693 = sbr.rel (%p691) target = $region52
      $region51: #{tpu_custom_call.1} parent=43 // pred_region
        %s694 = smul.u32 %s33, 32
        %v695 = vlaneseq
        %v696 = vshrl.u32 %v695, 7
        %v697 = vadd.s32 %v696, 8
        %v698 = vadd.s32 %v696, 16
        %v699 = vadd.s32 %v696, 24
        %v700 = vstv %s694
        %v701 = vadd.s32 %v700, %v696
        %v702 = vadd.s32 %v700, %v697
        %v703 = vadd.s32 %v700, %v698
        %v704 = vadd.s32 %v700, %v699
        %v705 = vld [vmem:[%s446] sm:$0x1]
        %v706 = vlaneseq
        %v707 = vshrl.u32 %v706, 7
        %v708 = vsub.s32 0, %v707
        %v709 = vrot.slane %v705, %v708
        %vm710 = vcmp.eq.s32.totalorder %v701, %v709
        %vm711 = vcmp.eq.s32.totalorder %v702, %v709
        %vm712 = vcmp.eq.s32.totalorder %v703, %v709
        %vm713 = vcmp.eq.s32.totalorder %v704, %v709
        %v714 = vsel %vm710, 0.0, -1e+30
        %v715 = vsel %vm711, 0.0, -1e+30
        %v716 = vsel %vm712, 0.0, -1e+30
        %v717 = vsel %vm713, 0.0, -1e+30
        %v718 = vld [vmem:[%s467] sm:$0xff]
        %v719 = vld [vmem:[%s467 + $0x8] sm:$0xff]
        %v720 = vld [vmem:[%s467 + $0x10] sm:$0xff]
        %v721 = vld [vmem:[%s467 + $0x18] sm:$0xff]
        %v722 = vld [vmem:[%s467 + $0x20] sm:$0xff]
        %v723 = vld [vmem:[%s467 + $0x28] sm:$0xff]
        %v724 = vld [vmem:[%s467 + $0x30] sm:$0xff]
        %v725 = vld [vmem:[%s467 + $0x38] sm:$0xff]
        %v726 = vld [vmem:[%s467 + $0x40] sm:$0xff]
        %v727 = vld [vmem:[%s467 + $0x48] sm:$0xff]
        %v728 = vld [vmem:[%s467 + $0x50] sm:$0xff]
        %v729 = vld [vmem:[%s467 + $0x58] sm:$0xff]
        %v730 = vld [vmem:[%s467 + $0x60] sm:$0xff]
        %v731 = vld [vmem:[%s467 + $0x68] sm:$0xff]
        %v732 = vld [vmem:[%s467 + $0x70] sm:$0xff]
        %v733 = vld [vmem:[%s467 + $0x78] sm:$0xff]
        %v734 = vld [vmem:[%s489] sm:$0xff]
        %v735 = vld [vmem:[%s489 + $0x8] sm:$0xff]
        %v736 = vld [vmem:[%s489 + $0x10] sm:$0xff]
        %v737 = vld [vmem:[%s489 + $0x18] sm:$0xff]
        %v738 = vld [vmem:[%s489 + $0x20] sm:$0xff]
        %v739 = vld [vmem:[%s489 + $0x28] sm:$0xff]
        %v740 = vld [vmem:[%s489 + $0x30] sm:$0xff]
        %v741 = vld [vmem:[%s489 + $0x38] sm:$0xff]
        %v742 = vld [vmem:[%s489 + $0x40] sm:$0xff]
        %v743 = vld [vmem:[%s489 + $0x48] sm:$0xff]
        %v744 = vld [vmem:[%s489 + $0x50] sm:$0xff]
        %v745 = vld [vmem:[%s489 + $0x58] sm:$0xff]
        %v746 = vld [vmem:[%s489 + $0x60] sm:$0xff]
        %v747 = vld [vmem:[%s489 + $0x68] sm:$0xff]
        %v748 = vld [vmem:[%s489 + $0x70] sm:$0xff]
        %v749 = vld [vmem:[%s489 + $0x78] sm:$0xff]
        %v750 = vld [vmem:[#allocation2] sm:$0xff]
        %v751 = vld [vmem:[#allocation2 + $0x8] sm:$0xff]
        %v752 = vld [vmem:[#allocation2 + $0x10] sm:$0xff]
        %v753 = vld [vmem:[#allocation2 + $0x18] sm:$0xff]
        %vm754 = vcmask 130048
        %v756 = vsel %vm754, %v750, 0
        %v759 = vsel %vm754, %v751, 0
        %v762 = vsel %vm754, %v752, 0
        %v765 = vsel %vm754, %v753, 0
        %v768 = vsel %vm754, %v718, 0
        %v771 = vsel %vm754, %v719, 0
        %v774 = vsel %vm754, %v720, 0
        %v777 = vsel %vm754, %v721, 0
        %v780 = vsel %vm754, %v722, 0
        %v783 = vsel %vm754, %v723, 0
        %v786 = vsel %vm754, %v724, 0
        %v789 = vsel %vm754, %v725, 0
        %v792 = vsel %vm754, %v726, 0
        %v795 = vsel %vm754, %v727, 0
        %v798 = vsel %vm754, %v728, 0
        %v801 = vsel %vm754, %v729, 0
        %v804 = vsel %vm754, %v730, 0
        %v807 = vsel %vm754, %v731, 0
        %v810 = vsel %vm754, %v732, 0
        %v813 = vsel %vm754, %v733, 0
        %815 = vmatprep.subr.mxu0 0.0
        %816 = vmatpush1.xpose.msra.mxu0 %v768
        %817 = vmatprep.subr.mxu0 0.0
        %818 = vmatpush1.xpose.msra.mxu0 %v771
        %819 = vmatprep.subr.mxu0 0.0
        %820 = vmatpush1.xpose.msra.mxu0 %v774
        %821 = vmatprep.subr.mxu0 0.0
        %822 = vmatpush1.xpose.msra.mxu0 %v777
        %823 = vmatprep.subr.mxu0 0.0
        %824 = vmatpush1.xpose.msra.mxu0 %v780
        %825 = vmatprep.subr.mxu0 0.0
        %826 = vmatpush1.xpose.msra.mxu0 %v783
        %827 = vmatprep.subr.mxu0 0.0
        %828 = vmatpush1.xpose.msra.mxu0 %v786
        %829 = vmatprep.subr.mxu0 0.0
        %830 = vmatpush1.xpose.msra.mxu0 %v789
        %831 = vmatprep.subr.mxu0 0.0
        %832 = vmatpush1.xpose.msra.mxu0 %v792
        %833 = vmatprep.subr.mxu0 0.0
        %834 = vmatpush1.xpose.msra.mxu0 %v795
        %835 = vmatprep.subr.mxu0 0.0
        %836 = vmatpush1.xpose.msra.mxu0 %v798
        %837 = vmatprep.subr.mxu0 0.0
        %838 = vmatpush1.xpose.msra.mxu0 %v801
        %839 = vmatprep.subr.mxu0 0.0
        %840 = vmatpush1.xpose.msra.mxu0 %v804
        %841 = vmatprep.subr.mxu0 0.0
        %842 = vmatpush1.xpose.msra.mxu0 %v807
        %843 = vmatprep.subr.mxu0 0.0
        %844 = vmatpush1.xpose.msra.mxu0 %v810
        %845 = vmatprep.subr.mxu0 0.0
        %846 = vmatpush1.xpose.msra.mxu0 %v813
        %847 = vmatprep.subr.mxu0 0.0
        %848 = vmatpush1.xpose.msra.mxu0 0.0
        %849 = vmatprep.subr.mxu0 0.0
        %850 = vmatpush1.xpose.msra.mxu0 0.0
        %851 = vmatprep.subr.mxu0 0.0
        %852 = vmatpush1.xpose.msra.mxu0 0.0
        %853 = vmatprep.subr.mxu0 0.0
        %854 = vmatpush1.xpose.msra.mxu0 0.0
        %855 = vmatprep.subr.mxu0 0.0
        %856 = vmatpush1.xpose.msra.mxu0 0.0
        %857 = vmatprep.subr.mxu0 0.0
        %858 = vmatpush1.xpose.msra.mxu0 0.0
        %859 = vmatprep.subr.mxu0 0.0
        %860 = vmatpush1.xpose.msra.mxu0 0.0
        %861 = vmatprep.subr.mxu0 0.0
        %862 = vmatpush1.xpose.msra.mxu0 0.0
        %863 = vmatprep.subr.mxu0 0.0
        %864 = vmatpush1.xpose.msra.mxu0 0.0
        %865 = vmatprep.subr.mxu0 0.0
        %866 = vmatpush1.xpose.msra.mxu0 0.0
        %867 = vmatprep.subr.mxu0 0.0
        %868 = vmatpush1.xpose.msra.mxu0 0.0
        %869 = vmatprep.subr.mxu0 0.0
        %870 = vmatpush1.xpose.msra.mxu0 0.0
        %871 = vmatprep.subr.mxu0 0.0
        %872 = vmatpush1.xpose.msra.mxu0 0.0
        %873 = vmatprep.subr.mxu0 0.0
        %874 = vmatpush1.xpose.msra.mxu0 0.0
        %875 = vmatprep.subr.mxu0 0.0
        %876 = vmatpush1.xpose.msra.mxu0 0.0
        %877 = vmatprep.subr.mxu0 0.0
        %878 = vmatpush1.xpose.msra.mxu0 0.0
        %879 = vmatprep.mubr.f32.mxu0 0.0
        %880 = vmatmul.mubr.f32.gmra.mrb[0].mxu0 %v756
        %v881 = vpop.f32.mrb[0].mxu0
        %v882 = vadd.f32 %v714, %v881
        %v883 = vpop.f32.mrb[0].mxu0
        %884 = vmatprep.mubr.f32.mxu0 0.0
        %885 = vmatmul.mubr.f32.gmra.mrb[0].mxu0 %v759
        %v886 = vpop.f32.mrb[0].mxu0
        %v887 = vadd.f32 %v715, %v886
        %v888 = vpop.f32.mrb[0].mxu0
        %889 = vmatprep.mubr.f32.mxu0 0.0
        %890 = vmatmul.mubr.f32.gmra.mrb[0].mxu0 %v762
        %v891 = vpop.f32.mrb[0].mxu0
        %v892 = vadd.f32 %v716, %v891
        %v893 = vpop.f32.mrb[0].mxu0
        %894 = vmatprep.mubr.f32.mxu0 0.0
        %895 = vmatmul.mubr.f32.gmra.mrb[0].mxu0 %v765
        %v896 = vpop.f32.mrb[0].mxu0
        %v897 = vadd.f32 %v717, %v896
        %v898 = vpop.f32.mrb[0].mxu0
        %899 = vdwg.mxu0
        %v900 = vld [vmem:[#allocation4] sm:$0xff]
        %v901 = vld [vmem:[#allocation4 + $0x8] sm:$0xff]
        %v902 = vld [vmem:[#allocation4 + $0x10] sm:$0xff]
        %v903 = vld [vmem:[#allocation4 + $0x18] sm:$0xff]
        %904 = vmax.xlane.f32.xlu0 %v882
        %v905 = vpop.xlane.xlu0 %904
        %906 = vmax.xlane.f32.xlu0 %v887
        %v907 = vpop.xlane.xlu0 %906
        %908 = vmax.xlane.f32.xlu0 %v892
        %v909 = vpop.xlane.xlu0 %908
        %910 = vmax.xlane.f32.xlu0 %v897
        %v911 = vpop.xlane.xlu0 %910
        %v912 = vmax.f32 %v900, %v905
        %v913 = vmax.f32 %v901, %v907
        %v914 = vmax.f32 %v902, %v909
        %v915 = vmax.f32 %v903, %v911
        %v916 = vsub.f32 %v900, %v912
        %v917 = vsub.f32 %v901, %v913
        %v918 = vsub.f32 %v902, %v914
        %v919 = vsub.f32 %v903, %v915
        %v920 = vmul.f32 %v916, 1.442695
        %v921 = vpow.pop %v920
        %v922 = vmul.f32 %v917, 1.442695
        %v923 = vpow.pop %v922
        %v924 = vmul.f32 %v918, 1.442695
        %v925 = vpow.pop %v924
        %v926 = vmul.f32 %v919, 1.442695
        %v927 = vpow.pop %v926
        %929 = vset.pattern.permute.xlu0 0
        %930 = vperm.xlu0 %929, %v912
        %v931 = vpop.permute.xlu0 %930
        %934 = vset.pattern.permute.xlu0 0
        %935 = vperm.xlu0 %934, %v913
        %v936 = vpop.permute.xlu0 %935
        %939 = vset.pattern.permute.xlu0 0
        %940 = vperm.xlu0 %939, %v914
        %v941 = vpop.permute.xlu0 %940
        %944 = vset.pattern.permute.xlu0 0
        %945 = vperm.xlu0 %944, %v915
        %v946 = vpop.permute.xlu0 %945
        %v948 = vsub.f32 %v882, %v931
        %v949 = vsub.f32 %v887, %v936
        %v950 = vsub.f32 %v892, %v941
        %v951 = vsub.f32 %v897, %v946
        %v952 = vmul.f32 %v948, 1.442695
        %v953 = vpow.pop %v952
        %v954 = vmul.f32 %v949, 1.442695
        %v955 = vpow.pop %v954
        %v956 = vmul.f32 %v950, 1.442695
        %v957 = vpow.pop %v956
        %v958 = vmul.f32 %v951, 1.442695
        %v959 = vpow.pop %v958
        %v960 = vsel %vm710, %v953, 0.0
        %v961 = vsel %vm711, %v955, 0.0
        %v962 = vsel %vm712, %v957, 0.0
        %v963 = vsel %vm713, %v959, 0.0
        %v964 = vld [vmem:[#allocation5] sm:$0xff]
        %v965 = vld [vmem:[#allocation5 + $0x8] sm:$0xff]
        %v966 = vld [vmem:[#allocation5 + $0x10] sm:$0xff]
        %v967 = vld [vmem:[#allocation5 + $0x18] sm:$0xff]
        %v968 = vmul.f32 %v921, %v964
        %v969 = vmul.f32 %v923, %v965
        %v970 = vmul.f32 %v925, %v966
        %v971 = vmul.f32 %v927, %v967
        %972 = vadd.xlane.f32.xlu0 %v960
        %v973 = vpop.xlane.xlu0 %972
        %974 = vadd.xlane.f32.xlu0 %v961
        %v975 = vpop.xlane.xlu0 %974
        %976 = vadd.xlane.f32.xlu0 %v962
        %v977 = vpop.xlane.xlu0 %976
        %978 = vadd.xlane.f32.xlu0 %v963
        %v979 = vpop.xlane.xlu0 %978
        %v980 = vadd.f32 %v968, %v973
        %v981 = vadd.f32 %v969, %v975
        %v982 = vadd.f32 %v970, %v977
        %v983 = vadd.f32 %v971, %v979
        %vm984 = vcmask 7168
        %985 = vst.msk [vmem:[#allocation5] sm:$0xff] %vm984, %v980
        %986 = vst.msk [vmem:[#allocation5 + $0x8] sm:$0xff] %vm984, %v981
        %987 = vst.msk [vmem:[#allocation5 + $0x10] sm:$0xff] %vm984, %v982
        %988 = vst.msk [vmem:[#allocation5 + $0x18] sm:$0xff] %vm984, %v983
        %v989 = vld [vmem:[#allocation6] sm:$0xff]
        %v990 = vld [vmem:[#allocation6 + $0x8] sm:$0xff]
        %v991 = vld [vmem:[#allocation6 + $0x10] sm:$0xff]
        %v992 = vld [vmem:[#allocation6 + $0x18] sm:$0xff]
        %994 = vset.pattern.permute.xlu0 0
        %995 = vperm.xlu0 %994, %v921
        %v996 = vpop.permute.xlu0 %995
        %999 = vset.pattern.permute.xlu0 0
        %1000 = vperm.xlu0 %999, %v923
        %v1001 = vpop.permute.xlu0 %1000
        %1004 = vset.pattern.permute.xlu0 0
        %1005 = vperm.xlu0 %1004, %v925
        %v1006 = vpop.permute.xlu0 %1005
        %1009 = vset.pattern.permute.xlu0 0
        %1010 = vperm.xlu0 %1009, %v927
        %v1011 = vpop.permute.xlu0 %1010
        %v1013 = vmul.f32 %v996, %v989
        %v1014 = vmul.f32 %v1001, %v990
        %v1015 = vmul.f32 %v1006, %v991
        %v1016 = vmul.f32 %v1011, %v992
        %1017 = vmatprep.subr.mxu0 0.0
        %1018 = vmatpush1.msra.mxu0 %v734
        %1019 = vmatprep.subr.mxu0 0.0
        %1020 = vmatpush1.msra.mxu0 %v735
        %1021 = vmatprep.subr.mxu0 0.0
        %1022 = vmatpush1.msra.mxu0 %v736
        %1023 = vmatprep.subr.mxu0 0.0
        %1024 = vmatpush1.msra.mxu0 %v737
        %1025 = vmatprep.subr.mxu0 0.0
        %1026 = vmatpush1.msra.mxu0 %v738
        %1027 = vmatprep.subr.mxu0 0.0
        %1028 = vmatpush1.msra.mxu0 %v739
        %1029 = vmatprep.subr.mxu0 0.0
        %1030 = vmatpush1.msra.mxu0 %v740
        %1031 = vmatprep.subr.mxu0 0.0
        %1032 = vmatpush1.msra.mxu0 %v741
        %1033 = vmatprep.subr.mxu0 0.0
        %1034 = vmatpush1.msra.mxu0 %v742
        %1035 = vmatprep.subr.mxu0 0.0
        %1036 = vmatpush1.msra.mxu0 %v743
        %1037 = vmatprep.subr.mxu0 0.0
        %1038 = vmatpush1.msra.mxu0 %v744
        %1039 = vmatprep.subr.mxu0 0.0
        %1040 = vmatpush1.msra.mxu0 %v745
        %1041 = vmatprep.subr.mxu0 0.0
        %1042 = vmatpush1.msra.mxu0 %v746
        %1043 = vmatprep.subr.mxu0 0.0
        %1044 = vmatpush1.msra.mxu0 %v747
        %1045 = vmatprep.subr.mxu0 0.0
        %1046 = vmatpush1.msra.mxu0 %v748
        %1047 = vmatprep.subr.mxu0 0.0
        %1048 = vmatpush1.msra.mxu0 %v749
        %1049 = vmatprep.subr.mxu0 0.0
        %1050 = vmatpush1.msra.mxu0 0.0
        %1051 = vmatprep.subr.mxu0 0.0
        %1052 = vmatpush1.msra.mxu0 0.0
        %1053 = vmatprep.subr.mxu0 0.0
        %1054 = vmatpush1.msra.mxu0 0.0
        %1055 = vmatprep.subr.mxu0 0.0
        %1056 = vmatpush1.msra.mxu0 0.0
        %1057 = vmatprep.subr.mxu0 0.0
        %1058 = vmatpush1.msra.mxu0 0.0
        %1059 = vmatprep.subr.mxu0 0.0
        %1060 = vmatpush1.msra.mxu0 0.0
        %1061 = vmatprep.subr.mxu0 0.0
        %1062 = vmatpush1.msra.mxu0 0.0
        %1063 = vmatprep.subr.mxu0 0.0
        %1064 = vmatpush1.msra.mxu0 0.0
        %1065 = vmatprep.subr.mxu0 0.0
        %1066 = vmatpush1.msra.mxu0 0.0
        %1067 = vmatprep.subr.mxu0 0.0
        %1068 = vmatpush1.msra.mxu0 0.0
        %1069 = vmatprep.subr.mxu0 0.0
        %1070 = vmatpush1.msra.mxu0 0.0
        %1071 = vmatprep.subr.mxu0 0.0
        %1072 = vmatpush1.msra.mxu0 0.0
        %1073 = vmatprep.subr.mxu0 0.0
        %1074 = vmatpush1.msra.mxu0 0.0
        %1075 = vmatprep.subr.mxu0 0.0
        %1076 = vmatpush1.msra.mxu0 0.0
        %1077 = vmatprep.subr.mxu0 0.0
        %1078 = vmatpush1.msra.mxu0 0.0
        %1079 = vmatprep.subr.mxu0 0.0
        %1080 = vmatpush1.msra.mxu0 0.0
        %1081 = vmatprep.mubr.f32.mxu0 0.0
        %1082 = vmatmul.mubr.f32.gmra.mrb[0].mxu0 %v960
        %v1083 = vpop.f32.mrb[0].mxu0
        %v1084 = vadd.f32 0.0, %v1083
        %v1085 = vpop.f32.mrb[0].mxu0
        %1086 = vmatprep.mubr.f32.mxu0 0.0
        %1087 = vmatmul.mubr.f32.gmra.mrb[0].mxu0 %v961
        %v1088 = vpop.f32.mrb[0].mxu0
        %v1089 = vadd.f32 0.0, %v1088
        %v1090 = vpop.f32.mrb[0].mxu0
        %1091 = vmatprep.mubr.f32.mxu0 0.0
        %1092 = vmatmul.mubr.f32.gmra.mrb[0].mxu0 %v962
        %v1093 = vpop.f32.mrb[0].mxu0
        %v1094 = vadd.f32 0.0, %v1093
        %v1095 = vpop.f32.mrb[0].mxu0
        %1096 = vmatprep.mubr.f32.mxu0 0.0
        %1097 = vmatmul.mubr.f32.gmra.mrb[0].mxu0 %v963
        %v1098 = vpop.f32.mrb[0].mxu0
        %v1099 = vadd.f32 0.0, %v1098
        %v1100 = vpop.f32.mrb[0].mxu0
        %1101 = vdwg.mxu0
        %v1102 = vadd.f32 %v1013, %v1084
        %v1103 = vadd.f32 %v1014, %v1089
        %v1104 = vadd.f32 %v1015, %v1094
        %v1105 = vadd.f32 %v1016, %v1099
        %1106 = vst.msk [vmem:[#allocation6] sm:$0xff] %vm754, %v1102
        %1107 = vst.msk [vmem:[#allocation6 + $0x8] sm:$0xff] %vm754, %v1103
        %1108 = vst.msk [vmem:[#allocation6 + $0x10] sm:$0xff] %vm754, %v1104
        %1109 = vst.msk [vmem:[#allocation6 + $0x18] sm:$0xff] %vm754, %v1105
        %1110 = vst.msk [vmem:[#allocation4] sm:$0xff] %vm984, %v912
        %1111 = vst.msk [vmem:[#allocation4 + $0x8] sm:$0xff] %vm984, %v913
        %1112 = vst.msk [vmem:[#allocation4 + $0x10] sm:$0xff] %vm984, %v914
        %1113 = vst.msk [vmem:[#allocation4 + $0x18] sm:$0xff] %vm984, %v915
        %s1114 = scalar_lea.vmem [#allocation2], 32
        %v1115 = vld [vmem:[%s1114] sm:$0xff]
        %v1116 = vld [vmem:[%s1114 + $0x8] sm:$0xff]
        %v1117 = vld [vmem:[%s1114 + $0x10] sm:$0xff]
        %v1118 = vld [vmem:[%s1114 + $0x18] sm:$0xff]
        %1119 = vrot.lane.b32.xlu0 %v718, 112
        %v1120 = vpop.permute.xlu0 %1119
        %1121 = vrot.lane.b32.xlu0 %v719, 112
        %v1122 = vpop.permute.xlu0 %1121
        %1123 = vrot.lane.b32.xlu0 %v720, 112
        %v1124 = vpop.permute.xlu0 %1123
        %1125 = vrot.lane.b32.xlu0 %v721, 112
        %v1126 = vpop.permute.xlu0 %1125
        %1127 = vrot.lane.b32.xlu0 %v722, 112
        %v1128 = vpop.permute.xlu0 %1127
        %1129 = vrot.lane.b32.xlu0 %v723, 112
        %v1130 = vpop.permute.xlu0 %1129
        %1131 = vrot.lane.b32.xlu0 %v724, 112
        %v1132 = vpop.permute.xlu0 %1131
        %1133 = vrot.lane.b32.xlu0 %v725, 112
        %v1134 = vpop.permute.xlu0 %1133
        %1135 = vrot.lane.b32.xlu0 %v726, 112
        %v1136 = vpop.permute.xlu0 %1135
        %1137 = vrot.lane.b32.xlu0 %v727, 112
        %v1138 = vpop.permute.xlu0 %1137
        %1139 = vrot.lane.b32.xlu0 %v728, 112
        %v1140 = vpop.permute.xlu0 %1139
        %1141 = vrot.lane.b32.xlu0 %v729, 112
        %v1142 = vpop.permute.xlu0 %1141
        %1143 = vrot.lane.b32.xlu0 %v730, 112
        %v1144 = vpop.permute.xlu0 %1143
        %1145 = vrot.lane.b32.xlu0 %v731, 112
        %v1146 = vpop.permute.xlu0 %1145
        %1147 = vrot.lane.b32.xlu0 %v732, 112
        %v1148 = vpop.permute.xlu0 %1147
        %1149 = vrot.lane.b32.xlu0 %v733, 112
        %v1150 = vpop.permute.xlu0 %1149
        %v1152 = vsel %vm754, %v1115, 0
        %v1155 = vsel %vm754, %v1116, 0
        %v1158 = vsel %vm754, %v1117, 0
        %v1161 = vsel %vm754, %v1118, 0
        %v1163 = vsel %vm754, %v1120, 0
        %v1165 = vsel %vm754, %v1122, 0
        %v1167 = vsel %vm754, %v1124, 0
        %v1169 = vsel %vm754, %v1126, 0
        %v1171 = vsel %vm754, %v1128, 0
        %v1173 = vsel %vm754, %v1130, 0
        %v1175 = vsel %vm754, %v1132, 0
        %v1177 = vsel %vm754, %v1134, 0
        %v1179 = vsel %vm754, %v1136, 0
        %v1181 = vsel %vm754, %v1138, 0
        %v1183 = vsel %vm754, %v1140, 0
        %v1185 = vsel %vm754, %v1142, 0
        %v1187 = vsel %vm754, %v1144, 0
        %v1189 = vsel %vm754, %v1146, 0
        %v1191 = vsel %vm754, %v1148, 0
        %v1193 = vsel %vm754, %v1150, 0
        %1195 = vmatprep.subr.mxu0 0.0
        %1196 = vmatpush1.xpose.msra.mxu0 %v1163
        %1197 = vmatprep.subr.mxu0 0.0
        %1198 = vmatpush1.xpose.msra.mxu0 %v1165
        %1199 = vmatprep.subr.mxu0 0.0
        %1200 = vmatpush1.xpose.msra.mxu0 %v1167
        %1201 = vmatprep.subr.mxu0 0.0
        %1202 = vmatpush1.xpose.msra.mxu0 %v1169
        %1203 = vmatprep.subr.mxu0 0.0
        %1204 = vmatpush1.xpose.msra.mxu0 %v1171
        %1205 = vmatprep.subr.mxu0 0.0
        %1206 = vmatpush1.xpose.msra.mxu0 %v1173
        %1207 = vmatprep.subr.mxu0 0.0
        %1208 = vmatpush1.xpose.msra.mxu0 %v1175
        %1209 = vmatprep.subr.mxu0 0.0
        %1210 = vmatpush1.xpose.msra.mxu0 %v1177
        %1211 = vmatprep.subr.mxu0 0.0
        %1212 = vmatpush1.xpose.msra.mxu0 %v1179
        %1213 = vmatprep.subr.mxu0 0.0
        %1214 = vmatpush1.xpose.msra.mxu0 %v1181
        %1215 = vmatprep.subr.mxu0 0.0
        %1216 = vmatpush1.xpose.msra.mxu0 %v1183
        %1217 = vmatprep.subr.mxu0 0.0
        %1218 = vmatpush1.xpose.msra.mxu0 %v1185
        %1219 = vmatprep.subr.mxu0 0.0
        %1220 = vmatpush1.xpose.msra.mxu0 %v1187
        %1221 = vmatprep.subr.mxu0 0.0
        %1222 = vmatpush1.xpose.msra.mxu0 %v1189
        %1223 = vmatprep.subr.mxu0 0.0
        %1224 = vmatpush1.xpose.msra.mxu0 %v1191
        %1225 = vmatprep.subr.mxu0 0.0
        %1226 = vmatpush1.xpose.msra.mxu0 %v1193
        %1227 = vmatprep.subr.mxu0 0.0
        %1228 = vmatpush1.xpose.msra.mxu0 0.0
        %1229 = vmatprep.subr.mxu0 0.0
        %1230 = vmatpush1.xpose.msra.mxu0 0.0
        %1231 = vmatprep.subr.mxu0 0.0
        %1232 = vmatpush1.xpose.msra.mxu0 0.0
        %1233 = vmatprep.subr.mxu0 0.0
        %1234 = vmatpush1.xpose.msra.mxu0 0.0
        %1235 = vmatprep.subr.mxu0 0.0
        %1236 = vmatpush1.xpose.msra.mxu0 0.0
        %1237 = vmatprep.subr.mxu0 0.0
        %1238 = vmatpush1.xpose.msra.mxu0 0.0
        %1239 = vmatprep.subr.mxu0 0.0
        %1240 = vmatpush1.xpose.msra.mxu0 0.0
        %1241 = vmatprep.subr.mxu0 0.0
        %1242 = vmatpush1.xpose.msra.mxu0 0.0
        %1243 = vmatprep.subr.mxu0 0.0
        %1244 = vmatpush1.xpose.msra.mxu0 0.0
        %1245 = vmatprep.subr.mxu0 0.0
        %1246 = vmatpush1.xpose.msra.mxu0 0.0
        %1247 = vmatprep.subr.mxu0 0.0
        %1248 = vmatpush1.xpose.msra.mxu0 0.0
        %1249 = vmatprep.subr.mxu0 0.0
        %1250 = vmatpush1.xpose.msra.mxu0 0.0
        %1251 = vmatprep.subr.mxu0 0.0
        %1252 = vmatpush1.xpose.msra.mxu0 0.0
        %1253 = vmatprep.subr.mxu0 0.0
        %1254 = vmatpush1.xpose.msra.mxu0 0.0
        %1255 = vmatprep.subr.mxu0 0.0
        %1256 = vmatpush1.xpose.msra.mxu0 0.0
        %1257 = vmatprep.subr.mxu0 0.0
        %1258 = vmatpush1.xpose.msra.mxu0 0.0
        %1259 = vmatprep.mubr.f32.mxu0 0.0
        %1260 = vmatmul.mubr.f32.gmra.mrb[0].mxu0 %v1152
        %v1261 = vpop.f32.mrb[0].mxu0
        %v1262 = vadd.f32 %v714, %v1261
        %v1263 = vpop.f32.mrb[0].mxu0
        %1264 = vmatprep.mubr.f32.mxu0 0.0
        %1265 = vmatmul.mubr.f32.gmra.mrb[0].mxu0 %v1155
        %v1266 = vpop.f32.mrb[0].mxu0
        %v1267 = vadd.f32 %v715, %v1266
        %v1268 = vpop.f32.mrb[0].mxu0
        %1269 = vmatprep.mubr.f32.mxu0 0.0
        %1270 = vmatmul.mubr.f32.gmra.mrb[0].mxu0 %v1158
        %v1271 = vpop.f32.mrb[0].mxu0
        %v1272 = vadd.f32 %v716, %v1271
        %v1273 = vpop.f32.mrb[0].mxu0
        %1274 = vmatprep.mubr.f32.mxu0 0.0
        %1275 = vmatmul.mubr.f32.gmra.mrb[0].mxu0 %v1161
        %v1276 = vpop.f32.mrb[0].mxu0
        %v1277 = vadd.f32 %v717, %v1276
        %v1278 = vpop.f32.mrb[0].mxu0
        %1279 = vdwg.mxu0
        %s1280 = scalar_lea.vmem [#allocation4], 32
        %v1281 = vld [vmem:[%s1280] sm:$0xff]
        %v1282 = vld [vmem:[%s1280 + $0x8] sm:$0xff]
        %v1283 = vld [vmem:[%s1280 + $0x10] sm:$0xff]
        %v1284 = vld [vmem:[%s1280 + $0x18] sm:$0xff]
        %1285 = vmax.xlane.f32.xlu0 %v1262
        %v1286 = vpop.xlane.xlu0 %1285
        %1287 = vmax.xlane.f32.xlu0 %v1267
        %v1288 = vpop.xlane.xlu0 %1287
        %1289 = vmax.xlane.f32.xlu0 %v1272
        %v1290 = vpop.xlane.xlu0 %1289
        %1291 = vmax.xlane.f32.xlu0 %v1277
        %v1292 = vpop.xlane.xlu0 %1291
        %v1293 = vmax.f32 %v1281, %v1286
        %v1294 = vmax.f32 %v1282, %v1288
        %v1295 = vmax.f32 %v1283, %v1290
        %v1296 = vmax.f32 %v1284, %v1292
        %v1297 = vsub.f32 %v1281, %v1293
        %v1298 = vsub.f32 %v1282, %v1294
        %v1299 = vsub.f32 %v1283, %v1295
        %v1300 = vsub.f32 %v1284, %v1296
        %v1301 = vmul.f32 %v1297, 1.442695
        %v1302 = vpow.pop %v1301
        %v1303 = vmul.f32 %v1298, 1.442695
        %v1304 = vpow.pop %v1303
        %v1305 = vmul.f32 %v1299, 1.442695
        %v1306 = vpow.pop %v1305
        %v1307 = vmul.f32 %v1300, 1.442695
        %v1308 = vpow.pop %v1307
        %1310 = vset.pattern.permute.xlu0 0
        %1311 = vperm.xlu0 %1310, %v1293
        %v1312 = vpop.permute.xlu0 %1311
        %1315 = vset.pattern.permute.xlu0 0
        %1316 = vperm.xlu0 %1315, %v1294
        %v1317 = vpop.permute.xlu0 %1316
        %1320 = vset.pattern.permute.xlu0 0
        %1321 = vperm.xlu0 %1320, %v1295
        %v1322 = vpop.permute.xlu0 %1321
        %1325 = vset.pattern.permute.xlu0 0
        %1326 = vperm.xlu0 %1325, %v1296
        %v1327 = vpop.permute.xlu0 %1326
        %v1329 = vsub.f32 %v1262, %v1312
        %v1330 = vsub.f32 %v1267, %v1317
        %v1331 = vsub.f32 %v1272, %v1322
        %v1332 = vsub.f32 %v1277, %v1327
        %v1333 = vmul.f32 %v1329, 1.442695
        %v1334 = vpow.pop %v1333
        %v1335 = vmul.f32 %v1330, 1.442695
        %v1336 = vpow.pop %v1335
        %v1337 = vmul.f32 %v1331, 1.442695
        %v1338 = vpow.pop %v1337
        %v1339 = vmul.f32 %v1332, 1.442695
        %v1340 = vpow.pop %v1339
        %v1341 = vsel %vm710, %v1334, 0.0
        %v1342 = vsel %vm711, %v1336, 0.0
        %v1343 = vsel %vm712, %v1338, 0.0
        %v1344 = vsel %vm713, %v1340, 0.0
        %s1345 = scalar_lea.vmem [#allocation5], 32
        %v1346 = vld [vmem:[%s1345] sm:$0xff]
        %v1347 = vld [vmem:[%s1345 + $0x8] sm:$0xff]
        %v1348 = vld [vmem:[%s1345 + $0x10] sm:$0xff]
        %v1349 = vld [vmem:[%s1345 + $0x18] sm:$0xff]
        %v1350 = vmul.f32 %v1302, %v1346
        %v1351 = vmul.f32 %v1304, %v1347
        %v1352 = vmul.f32 %v1306, %v1348
        %v1353 = vmul.f32 %v1308, %v1349
        %1354 = vadd.xlane.f32.xlu0 %v1341
        %v1355 = vpop.xlane.xlu0 %1354
        %1356 = vadd.xlane.f32.xlu0 %v1342
        %v1357 = vpop.xlane.xlu0 %1356
        %1358 = vadd.xlane.f32.xlu0 %v1343
        %v1359 = vpop.xlane.xlu0 %1358
        %1360 = vadd.xlane.f32.xlu0 %v1344
        %v1361 = vpop.xlane.xlu0 %1360
        %v1362 = vadd.f32 %v1350, %v1355
        %v1363 = vadd.f32 %v1351, %v1357
        %v1364 = vadd.f32 %v1352, %v1359
        %v1365 = vadd.f32 %v1353, %v1361
        %1366 = vst.msk [vmem:[%s1345] sm:$0xff] %vm984, %v1362
        %1367 = vst.msk [vmem:[%s1345 + $0x8] sm:$0xff] %vm984, %v1363
        %1368 = vst.msk [vmem:[%s1345 + $0x10] sm:$0xff] %vm984, %v1364
        %1369 = vst.msk [vmem:[%s1345 + $0x18] sm:$0xff] %vm984, %v1365
        %s1370 = scalar_lea.vmem [#allocation6], 32
        %v1371 = vld [vmem:[%s1370] sm:$0xff]
        %v1372 = vld [vmem:[%s1370 + $0x8] sm:$0xff]
        %v1373 = vld [vmem:[%s1370 + $0x10] sm:$0xff]
        %v1374 = vld [vmem:[%s1370 + $0x18] sm:$0xff]
        %1376 = vset.pattern.permute.xlu0 0
        %1377 = vperm.xlu0 %1376, %v1302
        %v1378 = vpop.permute.xlu0 %1377
        %1381 = vset.pattern.permute.xlu0 0
        %1382 = vperm.xlu0 %1381, %v1304
        %v1383 = vpop.permute.xlu0 %1382
        %1386 = vset.pattern.permute.xlu0 0
        %1387 = vperm.xlu0 %1386, %v1306
        %v1388 = vpop.permute.xlu0 %1387
        %1391 = vset.pattern.permute.xlu0 0
        %1392 = vperm.xlu0 %1391, %v1308
        %v1393 = vpop.permute.xlu0 %1392
        %v1395 = vmul.f32 %v1378, %v1371
        %v1396 = vmul.f32 %v1383, %v1372
        %v1397 = vmul.f32 %v1388, %v1373
        %v1398 = vmul.f32 %v1393, %v1374
        %1415 = vrot.lane.b32.xlu0 %v734, 112
        %v1416 = vpop.permute.xlu0 %1415
        %1417 = vrot.lane.b32.xlu0 %v735, 112
        %v1418 = vpop.permute.xlu0 %1417
        %1419 = vrot.lane.b32.xlu0 %v736, 112
        %v1420 = vpop.permute.xlu0 %1419
        %1421 = vrot.lane.b32.xlu0 %v737, 112
        %v1422 = vpop.permute.xlu0 %1421
        %1423 = vrot.lane.b32.xlu0 %v738, 112
        %v1424 = vpop.permute.xlu0 %1423
        %1425 = vrot.lane.b32.xlu0 %v739, 112
        %v1426 = vpop.permute.xlu0 %1425
        %1427 = vrot.lane.b32.xlu0 %v740, 112
        %v1428 = vpop.permute.xlu0 %1427
        %1429 = vrot.lane.b32.xlu0 %v741, 112
        %v1430 = vpop.permute.xlu0 %1429
        %1431 = vrot.lane.b32.xlu0 %v742, 112
        %v1432 = vpop.permute.xlu0 %1431
        %1433 = vrot.lane.b32.xlu0 %v743, 112
        %v1434 = vpop.permute.xlu0 %1433
        %1435 = vrot.lane.b32.xlu0 %v744, 112
        %v1436 = vpop.permute.xlu0 %1435
        %1437 = vrot.lane.b32.xlu0 %v745, 112
        %v1438 = vpop.permute.xlu0 %1437
        %1439 = vrot.lane.b32.xlu0 %v746, 112
        %v1440 = vpop.permute.xlu0 %1439
        %1441 = vrot.lane.b32.xlu0 %v747, 112
        %v1442 = vpop.permute.xlu0 %1441
        %1443 = vrot.lane.b32.xlu0 %v748, 112
        %v1444 = vpop.permute.xlu0 %1443
        %1445 = vrot.lane.b32.xlu0 %v749, 112
        %v1446 = vpop.permute.xlu0 %1445
        %1463 = vmatprep.subr.mxu0 0.0
        %1464 = vmatpush1.msra.mxu0 %v1416
        %1465 = vmatprep.subr.mxu0 0.0
        %1466 = vmatpush1.msra.mxu0 %v1418
        %1467 = vmatprep.subr.mxu0 0.0
        %1468 = vmatpush1.msra.mxu0 %v1420
        %1469 = vmatprep.subr.mxu0 0.0
        %1470 = vmatpush1.msra.mxu0 %v1422
        %1471 = vmatprep.subr.mxu0 0.0
        %1472 = vmatpush1.msra.mxu0 %v1424
        %1473 = vmatprep.subr.mxu0 0.0
        %1474 = vmatpush1.msra.mxu0 %v1426
        %1475 = vmatprep.subr.mxu0 0.0
        %1476 = vmatpush1.msra.mxu0 %v1428
        %1477 = vmatprep.subr.mxu0 0.0
        %1478 = vmatpush1.msra.mxu0 %v1430
        %1479 = vmatprep.subr.mxu0 0.0
        %1480 = vmatpush1.msra.mxu0 %v1432
        %1481 = vmatprep.subr.mxu0 0.0
        %1482 = vmatpush1.msra.mxu0 %v1434
        %1483 = vmatprep.subr.mxu0 0.0
        %1484 = vmatpush1.msra.mxu0 %v1436
        %1485 = vmatprep.subr.mxu0 0.0
        %1486 = vmatpush1.msra.mxu0 %v1438
        %1487 = vmatprep.subr.mxu0 0.0
        %1488 = vmatpush1.msra.mxu0 %v1440
        %1489 = vmatprep.subr.mxu0 0.0
        %1490 = vmatpush1.msra.mxu0 %v1442
        %1491 = vmatprep.subr.mxu0 0.0
        %1492 = vmatpush1.msra.mxu0 %v1444
        %1493 = vmatprep.subr.mxu0 0.0
        %1494 = vmatpush1.msra.mxu0 %v1446
        %1495 = vmatprep.subr.mxu0 0.0
        %1496 = vmatpush1.msra.mxu0 0.0
        %1497 = vmatprep.subr.mxu0 0.0
        %1498 = vmatpush1.msra.mxu0 0.0
        %1499 = vmatprep.subr.mxu0 0.0
        %1500 = vmatpush1.msra.mxu0 0.0
        %1501 = vmatprep.subr.mxu0 0.0
        %1502 = vmatpush1.msra.mxu0 0.0
        %1503 = vmatprep.subr.mxu0 0.0
        %1504 = vmatpush1.msra.mxu0 0.0
        %1505 = vmatprep.subr.mxu0 0.0
        %1506 = vmatpush1.msra.mxu0 0.0
        %1507 = vmatprep.subr.mxu0 0.0
        %1508 = vmatpush1.msra.mxu0 0.0
        %1509 = vmatprep.subr.mxu0 0.0
        %1510 = vmatpush1.msra.mxu0 0.0
        %1511 = vmatprep.subr.mxu0 0.0
        %1512 = vmatpush1.msra.mxu0 0.0
        %1513 = vmatprep.subr.mxu0 0.0
        %1514 = vmatpush1.msra.mxu0 0.0
        %1515 = vmatprep.subr.mxu0 0.0
        %1516 = vmatpush1.msra.mxu0 0.0
        %1517 = vmatprep.subr.mxu0 0.0
        %1518 = vmatpush1.msra.mxu0 0.0
        %1519 = vmatprep.subr.mxu0 0.0
        %1520 = vmatpush1.msra.mxu0 0.0
        %1521 = vmatprep.subr.mxu0 0.0
        %1522 = vmatpush1.msra.mxu0 0.0
        %1523 = vmatprep.subr.mxu0 0.0
        %1524 = vmatpush1.msra.mxu0 0.0
        %1525 = vmatprep.subr.mxu0 0.0
        %1526 = vmatpush1.msra.mxu0 0.0
        %1527 = vmatprep.mubr.f32.mxu0 0.0
        %1528 = vmatmul.mubr.f32.gmra.mrb[0].mxu0 %v1341
        %v1529 = vpop.f32.mrb[0].mxu0
        %v1530 = vadd.f32 0.0, %v1529
        %v1531 = vpop.f32.mrb[0].mxu0
        %1532 = vmatprep.mubr.f32.mxu0 0.0
        %1533 = vmatmul.mubr.f32.gmra.mrb[0].mxu0 %v1342
        %v1534 = vpop.f32.mrb[0].mxu0
        %v1535 = vadd.f32 0.0, %v1534
        %v1536 = vpop.f32.mrb[0].mxu0
        %1537 = vmatprep.mubr.f32.mxu0 0.0
        %1538 = vmatmul.mubr.f32.gmra.mrb[0].mxu0 %v1343
        %v1539 = vpop.f32.mrb[0].mxu0
        %v1540 = vadd.f32 0.0, %v1539
        %v1541 = vpop.f32.mrb[0].mxu0
        %1542 = vmatprep.mubr.f32.mxu0 0.0
        %1543 = vmatmul.mubr.f32.gmra.mrb[0].mxu0 %v1344
        %v1544 = vpop.f32.mrb[0].mxu0
        %v1545 = vadd.f32 0.0, %v1544
        %v1546 = vpop.f32.mrb[0].mxu0
        %1547 = vdwg.mxu0
        %v1548 = vadd.f32 %v1395, %v1530
        %v1549 = vadd.f32 %v1396, %v1535
        %v1550 = vadd.f32 %v1397, %v1540
        %v1551 = vadd.f32 %v1398, %v1545
        %1552 = vst.msk [vmem:[%s1370] sm:$0xff] %vm754, %v1548
        %1553 = vst.msk [vmem:[%s1370 + $0x8] sm:$0xff] %vm754, %v1549
        %1554 = vst.msk [vmem:[%s1370 + $0x10] sm:$0xff] %vm754, %v1550
        %1555 = vst.msk [vmem:[%s1370 + $0x18] sm:$0xff] %vm754, %v1551
        %1556 = vst.msk [vmem:[%s1280] sm:$0xff] %vm984, %v1293
        %1557 = vst.msk [vmem:[%s1280 + $0x8] sm:$0xff] %vm984, %v1294
        %1558 = vst.msk [vmem:[%s1280 + $0x10] sm:$0xff] %vm984, %v1295
        %1559 = vst.msk [vmem:[%s1280 + $0x18] sm:$0xff] %vm984, %v1296
      $region52: #{tpu_custom_call.1} parent=43 // pred_fallthru
        _
      %p1560 = scmp.eq.s32.totalorder %s34, 1
      // Predicated region
      $region53: #{tpu_custom_call.1} parent=43 // pred_check
        %p1561 = pneg %p1560
      $region54: #{tpu_custom_call.1} parent=43 // pred_check_branch
        %1563 = sbr.rel (%p1561) target = $region56
      $region55: #{tpu_custom_call.1} parent=43 // pred_region
        %v1564 = vld [vmem:[#allocation5] sm:$0xff]
        %v1565 = vld [vmem:[#allocation5 + $0x8] sm:$0xff]
        %v1566 = vld [vmem:[#allocation5 + $0x10] sm:$0xff]
        %v1567 = vld [vmem:[#allocation5 + $0x18] sm:$0xff]
        %vm1568 = vcmp.gt.f32.partialorder %v1564, 0.0
        %vm1569 = vcmp.gt.f32.partialorder %v1565, 0.0
        %vm1570 = vcmp.gt.f32.partialorder %v1566, 0.0
        %vm1571 = vcmp.gt.f32.partialorder %v1567, 0.0
        %v1572 = vrcp.pop %v1564
        %v1573 = vmul.f32 1.0, %v1572
        %v1574 = vrcp.pop %v1565
        %v1575 = vmul.f32 1.0, %v1574
        %v1576 = vrcp.pop %v1566
        %v1577 = vmul.f32 1.0, %v1576
        %v1578 = vrcp.pop %v1567
        %v1579 = vmul.f32 1.0, %v1578
        %v1580 = vsel %vm1568, %v1573, 0.0
        %v1581 = vsel %vm1569, %v1575, 0.0
        %v1582 = vsel %vm1570, %v1577, 0.0
        %v1583 = vsel %vm1571, %v1579, 0.0
        %v1584 = vld [vmem:[#allocation6] sm:$0xff]
        %v1585 = vld [vmem:[#allocation6 + $0x8] sm:$0xff]
        %v1586 = vld [vmem:[#allocation6 + $0x10] sm:$0xff]
        %v1587 = vld [vmem:[#allocation6 + $0x18] sm:$0xff]
        %1589 = vset.pattern.permute.xlu0 0
        %1590 = vperm.xlu0 %1589, %v1580
        %v1591 = vpop.permute.xlu0 %1590
        %1594 = vset.pattern.permute.xlu0 0
        %1595 = vperm.xlu0 %1594, %v1581
        %v1596 = vpop.permute.xlu0 %1595
        %1599 = vset.pattern.permute.xlu0 0
        %1600 = vperm.xlu0 %1599, %v1582
        %v1601 = vpop.permute.xlu0 %1600
        %1604 = vset.pattern.permute.xlu0 0
        %1605 = vperm.xlu0 %1604, %v1583
        %v1606 = vpop.permute.xlu0 %1605
        %v1608 = vmul.f32 %v1584, %v1591
        %v1609 = vmul.f32 %v1585, %v1596
        %v1610 = vmul.f32 %v1586, %v1601
        %v1611 = vmul.f32 %v1587, %v1606
        %s1612 = scalar_lea.vmem [#allocation5], 32
        %v1613 = vld [vmem:[%s1612] sm:$0xff]
        %v1614 = vld [vmem:[%s1612 + $0x8] sm:$0xff]
        %v1615 = vld [vmem:[%s1612 + $0x10] sm:$0xff]
        %v1616 = vld [vmem:[%s1612 + $0x18] sm:$0xff]
        %vm1617 = vcmp.gt.f32.partialorder %v1613, 0.0
        %vm1618 = vcmp.gt.f32.partialorder %v1614, 0.0
        %vm1619 = vcmp.gt.f32.partialorder %v1615, 0.0
        %vm1620 = vcmp.gt.f32.partialorder %v1616, 0.0
        %v1621 = vrcp.pop %v1613
        %v1622 = vmul.f32 1.0, %v1621
        %v1623 = vrcp.pop %v1614
        %v1624 = vmul.f32 1.0, %v1623
        %v1625 = vrcp.pop %v1615
        %v1626 = vmul.f32 1.0, %v1625
        %v1627 = vrcp.pop %v1616
        %v1628 = vmul.f32 1.0, %v1627
        %v1629 = vsel %vm1617, %v1622, 0.0
        %v1630 = vsel %vm1618, %v1624, 0.0
        %v1631 = vsel %vm1619, %v1626, 0.0
        %v1632 = vsel %vm1620, %v1628, 0.0
        %s1633 = scalar_lea.vmem [#allocation6], 32
        %v1634 = vld [vmem:[%s1633] sm:$0xff]
        %v1635 = vld [vmem:[%s1633 + $0x8] sm:$0xff]
        %v1636 = vld [vmem:[%s1633 + $0x10] sm:$0xff]
        %v1637 = vld [vmem:[%s1633 + $0x18] sm:$0xff]
        %1639 = vset.pattern.permute.xlu0 0
        %1640 = vperm.xlu0 %1639, %v1629
        %v1641 = vpop.permute.xlu0 %1640
        %1644 = vset.pattern.permute.xlu0 0
        %1645 = vperm.xlu0 %1644, %v1630
        %v1646 = vpop.permute.xlu0 %1645
        %1649 = vset.pattern.permute.xlu0 0
        %1650 = vperm.xlu0 %1649, %v1631
        %v1651 = vpop.permute.xlu0 %1650
        %1654 = vset.pattern.permute.xlu0 0
        %1655 = vperm.xlu0 %1654, %v1632
        %v1656 = vpop.permute.xlu0 %1655
        %v1658 = vmul.f32 %v1634, %v1641
        %v1659 = vmul.f32 %v1635, %v1646
        %v1660 = vmul.f32 %v1636, %v1651
        %v1661 = vmul.f32 %v1637, %v1656
        %1666 = vrot.lane.b32.xlu0 %v1658, 16
        %v1667 = vpop.permute.xlu0 %1666
        %1668 = vrot.lane.b32.xlu0 %v1659, 16
        %v1669 = vpop.permute.xlu0 %1668
        %1670 = vrot.lane.b32.xlu0 %v1660, 16
        %v1671 = vpop.permute.xlu0 %1670
        %1672 = vrot.lane.b32.xlu0 %v1661, 16
        %v1673 = vpop.permute.xlu0 %1672
        %vm1678 = vcmask 130048
        %v1679 = vsel %vm1678, %v1608, %v1667
        %v1680 = vsel %vm1678, %v1609, %v1669
        %v1681 = vsel %vm1678, %v1610, %v1671
        %v1682 = vsel %vm1678, %v1611, %v1673
        %v1683 = vld [vmem:[#allocation3] sm:$0xff]
        %v1684 = vld [vmem:[#allocation3 + $0x8] sm:$0xff]
        %v1685 = vld [vmem:[#allocation3 + $0x10] sm:$0xff]
        %v1686 = vld [vmem:[#allocation3 + $0x18] sm:$0xff]
        %v1687 = vadd.f32 %v1679, %v1683
        %v1688 = vadd.f32 %v1680, %v1684
        %v1689 = vadd.f32 %v1681, %v1685
        %v1690 = vadd.f32 %v1682, %v1686
        %vm1691 = vcmask 261120
        %1692 = vst.msk [vmem:[%s503] sm:$0xff] %vm1691, %v1687
        %1693 = vst.msk [vmem:[%s503 + $0x8] sm:$0xff] %vm1691, %v1688
        %1694 = vst.msk [vmem:[%s503 + $0x10] sm:$0xff] %vm1691, %v1689
        %1695 = vst.msk [vmem:[%s503 + $0x18] sm:$0xff] %vm1691, %v1690
      $region56: #{tpu_custom_call.1} parent=43 // pred_fallthru
        _
      %s1696 = smul.u32 4, %s33
      %p1697 = scmp.lt.s32.totalorder %s1696, 7
      %s1698 = scalar_select %p1697, %s1696, 7
      %s1699 = smul.addr %s1698, 8
      %s1700 = scalar_lea.vmem %s8, %s1699
      // Predicated region
      $region57: #{tpu_custom_call.1} parent=43 // pred_check
        %p1701 = pneg %p253
      $region58: #{tpu_custom_call.1} parent=43 // pred_check_branch
        %1703 = sbr.rel (%p1701) target = $region60
      $region59: #{tpu_custom_call.1} parent=43 // pred_region
        %s1704 = smul.u32 4, %s33
      $region60: #{tpu_custom_call.1} parent=43 // pred_fallthru
        _
    $region44: #{tpu_custom_call.1} parent=5 // pred_fallthru
      _
    %p1705 = scmp.le.s32.totalorder 2, %s24
    // Predicated region
    $region61: #{tpu_custom_call.1} parent=5 // pred_check
      %p1706 = pneg %p1705
    $region62: #{tpu_custom_call.1} parent=5 // pred_check_branch
      %1708 = sbr.rel (%p1706) target = $region64
    $region63: #{tpu_custom_call.1} parent=5 // pred_region
      %s1709 = ssub.s32 %s24, 2
      // Predicated region
      $region65: #{tpu_custom_call.1} parent=63 // pred_check
        %p1710 = pneg %p259
      $region66: #{tpu_custom_call.1} parent=63 // pred_check_branch
        %1712 = sbr.rel (%p1710) target = $region68
      $region67: #{tpu_custom_call.1} parent=63 // pred_region
        %s1713 = smul.u32 4, %s35
        %p1714 = scmp.lt.s32.totalorder %s1713, 7
        %s1715 = scalar_select %p1714, %s1713, 7
        %s1716 = smul.addr %s1715, 8
        %s1717 = scalar_lea.vmem %s8, %s1716
      $region68: #{tpu_custom_call.1} parent=63 // pred_fallthru
        _
    $region64: #{tpu_custom_call.1} parent=5 // pred_fallthru
      _
  $region6: #{tpu_custom_call.1} parent=0 // loop_footer
    %s28 = sadd.s32 1, %s24
  $region7: #{tpu_custom_call.1} parent=0 // loop_footer_branch
    %23 = sbr.rel target = $region3
  $region8: #{tpu_custom_call.1} parent=0 // loop_exit
    _

</llo_original>
